<compile_context>
chip_gen: v6e
topology: v6e:2x2x1
jax: 0.10.0
libtpu: 0.0.40
codegen_flags: <defaults>
</compile_context>

<pallas_src>
import jax
import jax.numpy as jnp
from jax.experimental import pallas as pl
from jax.experimental.pallas import tpu as pltpu


# Model / input dimensions (small shapes consistent with the module usage).
BATCH = 2
CIN = 4
H = 16
W = 16
CMID = 8               # conv1 output channels
CFEAT = 16             # conv2 output channels == feature dim
NUM_CLASSES = 10
M = BATCH * H * W      # 512 pixels; lane axis everywhere
K1 = 9 * CIN           # 36  im2col contraction depth, conv1
K2 = 9 * CMID          # 72  im2col contraction depth, conv2


# ----------------------------- fused kernel -------------------------------- #

def _fused_forward_kernel(x_ref, mask_ref, w1_ref, b1_ref, w2_ref, b2_ref,
                          pool_ref, fcw_ref, fcb_ref, o_ref,
                          col1_ref, col2_ref):
    """conv3x3(4->8)+ReLU -> conv3x3(8->16)+ReLU -> GAP -> Linear(16->10).

    All activations are (C, M): channels on sublanes, the 512 pixels on lanes.
    """
    x = x_ref[...]                                              # (CIN, M) f32

    # ---- conv1: build (9*CIN, M) im2col via lane rolls + boundary masks ----
    for k in range(9):
        dy, dx = divmod(k, 3)
        delta = (dy - 1) * W + (dx - 1)                         # pixel offset
        tap = pltpu.roll(x, shift=(-delta) % M, axis=1)         # (CIN, M)
        col1_ref[pl.ds(k * CIN, CIN), :] = tap * mask_ref[pl.ds(k, 1), :]
    h1 = jnp.dot(w1_ref[...], col1_ref[...].astype(jnp.bfloat16),
                 preferred_element_type=jnp.float32)            # (CMID, M)
    h1 = jnp.maximum(h1 + b1_ref[...], 0.0)

    # ---- conv2: same trick on the (CMID, M) hidden activation --------------
    for k in range(9):
        dy, dx = divmod(k, 3)
        delta = (dy - 1) * W + (dx - 1)
        tap = pltpu.roll(h1, shift=(-delta) % M, axis=1)        # (CMID, M)
        col2_ref[pl.ds(k * CMID, CMID), :] = tap * mask_ref[pl.ds(k, 1), :]
    h2 = jnp.dot(w2_ref[...], col2_ref[...].astype(jnp.bfloat16),
                 preferred_element_type=jnp.float32)            # (CFEAT, M)
    h2 = jnp.maximum(h2 + b2_ref[...], 0.0)

    # ---- global average pool as an MXU matmul: (CFEAT, M) @ (M, B) ---------
    feat = jnp.dot(h2.astype(jnp.bfloat16), pool_ref[...],
                   preferred_element_type=jnp.float32)          # (CFEAT, B)

    # ---- linear head: (NC, CFEAT) @ (CFEAT, B) + bias ----------------------
    logits_t = jnp.dot(fcw_ref[...], feat.astype(jnp.bfloat16),
                       preferred_element_type=jnp.float32) + fcb_ref[...]
    o_ref[...] = logits_t                                       # (NC, B) f32


# ------------------------- params & forward wrapper ------------------------ #

def init_params(key):
    k1, k2, k3 = jax.random.split(key, 3)

    def he(k, shape, fan_in):
        return jax.random.normal(k, shape, jnp.float32) * (2.0 / fan_in) ** 0.5

    return {
        # PyTorch layouts: conv weights OIHW, linear weight (out, in).
        "conv1_w": he(k1, (CMID, CIN, 3, 3), CIN * 9),
        "conv1_b": jnp.zeros((CMID,), jnp.float32),
        "conv2_w": he(k2, (CFEAT, CMID, 3, 3), CMID * 9),
        "conv2_b": jnp.zeros((CFEAT,), jnp.float32),
        "fc_w":    he(k3, (NUM_CLASSES, CFEAT), CFEAT),
        "fc_b":    jnp.zeros((NUM_CLASSES,), jnp.float32),
    }


def _boundary_masks():
    """mask[k, m] = 1 if tap k of output pixel m falls inside the image."""
    m = jnp.arange(M)
    yy = (m % (H * W)) // W
    xx = m % W
    rows = []
    for k in range(9):
        dy, dx = divmod(k, 3)
        iy, ix = yy + dy - 1, xx + dx - 1
        rows.append((iy >= 0) & (iy < H) & (ix >= 0) & (ix < W))
    return jnp.stack(rows).astype(jnp.float32)                  # (9, M)


def finetune_net_forward(params, target_nchw):
    """finetuneNet.forward: returns self.base_network(target)[0] (the logits)."""
    x = target_nchw.astype(jnp.float32)
    # Single boundary layout change: NCHW -> channels-first flat (CIN, B*H*W).
    x_cm = jnp.transpose(x, (1, 0, 2, 3)).reshape(CIN, M)

    # Conv weights OIHW -> (Cout, k*Cin + ci) with k = dy*3 + dx (im2col order).
    w1 = jnp.transpose(params["conv1_w"], (0, 2, 3, 1)).reshape(CMID, K1)
    w2 = jnp.transpose(params["conv2_w"], (0, 2, 3, 1)).reshape(CFEAT, K2)
    w1 = w1.astype(jnp.bfloat16)
    w2 = w2.astype(jnp.bfloat16)
    b1 = params["conv1_b"].reshape(CMID, 1).astype(jnp.float32)
    b2 = params["conv2_b"].reshape(CFEAT, 1).astype(jnp.float32)
    fcw = params["fc_w"].astype(jnp.bfloat16)                   # (NC, CFEAT)
    fcb = params["fc_b"].reshape(NUM_CLASSES, 1).astype(jnp.float32)

    masks = _boundary_masks()                                   # (9, M) f32
    # GAP pooling matrix: pool[m, b] = 1/(H*W) on batch b's own pixel columns.
    pool = ((jnp.arange(M)[:, None] // (H * W)) ==
            jnp.arange(BATCH)[None, :]).astype(jnp.float32) / (H * W)
    pool = pool.astype(jnp.bfloat16)                            # (M, B)

    logits_t = pl.pallas_call(
        _fused_forward_kernel,
        out_shape=jax.ShapeDtypeStruct((NUM_CLASSES, BATCH), jnp.float32),
        grid=(1,),
        in_specs=[
            pl.BlockSpec((CIN, M), lambda i: (0, 0)),             # x (C, M)
            pl.BlockSpec((9, M), lambda i: (0, 0)),               # boundary masks
            pl.BlockSpec((CMID, K1), lambda i: (0, 0)),           # w1 (im2col)
            pl.BlockSpec((CMID, 1), lambda i: (0, 0)),            # b1
            pl.BlockSpec((CFEAT, K2), lambda i: (0, 0)),          # w2 (im2col)
            pl.BlockSpec((CFEAT, 1), lambda i: (0, 0)),           # b2
            pl.BlockSpec((M, BATCH), lambda i: (0, 0)),           # pool
            pl.BlockSpec((NUM_CLASSES, CFEAT), lambda i: (0, 0)), # fc_w
            pl.BlockSpec((NUM_CLASSES, 1), lambda i: (0, 0)),     # fc_b
        ],
        out_specs=pl.BlockSpec((NUM_CLASSES, BATCH), lambda i: (0, 0)),
        scratch_shapes=[
            pltpu.VMEM((K1, M), jnp.float32),    # conv1 im2col (36, 512)
            pltpu.VMEM((K2, M), jnp.float32),    # conv2 im2col (72, 512)
        ],
        compiler_params=pltpu.CompilerParams(
            dimension_semantics=("arbitrary",)),
    )(x_cm, masks, w1, b1, w2, b2, pool, fcw, fcb)

    return jnp.transpose(logits_t)                              # (B, NC)


# ------------------------- pure-JAX reference ------------------------------ #

def _reference_forward(params, x):
    dn = ("NCHW", "OIHW", "NCHW")
    h = jax.lax.conv_general_dilated(x, params["conv1_w"], (1, 1),
                                     ((1, 1), (1, 1)), dimension_numbers=dn)
    h = jax.nn.relu(h + params["conv1_b"][None, :, None, None])
    h = jax.lax.conv_general_dilated(h, params["conv2_w"], (1, 1),
                                     ((1, 1), (1, 1)), dimension_numbers=dn)
    h = jax.nn.relu(h + params["conv2_b"][None, :, None, None])
    feat = h.mean(axis=(2, 3))                                  # (B, CFEAT)
    return feat @ params["fc_w"].T + params["fc_b"]


# --------------------------------- main ------------------------------------ #

if __name__ == "__main__":
    key = jax.random.PRNGKey(0)
    k_x, k_p = jax.random.split(key)

    # NCHW input like the PyTorch module: batch=2, channels=4, spatial=16x16.
    x = jax.random.normal(k_x, (BATCH, CIN, H, W), jnp.float32)
    params = init_params(k_p)

    out = jax.jit(finetune_net_forward)(params, x)
    out = jax.block_until_ready(out)

    assert out.shape == (BATCH, NUM_CLASSES), out.shape
    assert out.dtype == jnp.float32
    assert bool(jnp.all(jnp.isfinite(out)))

    # bf16 MXU operands (f32 accumulation) -> loose tolerance vs f32 reference.
    ref = _reference_forward(params, x)
    assert bool(jnp.allclose(out, ref, atol=5e-2, rtol=5e-2)), (out, ref)

    print("KERNEL_OK")
</pallas_src>

<mosaic_0001>
module attributes {stable_mosaic.version = 11 : i64} {
  func.func @_fused_forward_kernel(%arg0: i32, %arg1: memref<4x512xf32, #tpu.memory_space<vmem>>, %arg2: memref<9x512xf32, #tpu.memory_space<vmem>>, %arg3: memref<8x36xbf16, #tpu.memory_space<vmem>>, %arg4: memref<8x1xf32, #tpu.memory_space<vmem>>, %arg5: memref<16x72xbf16, #tpu.memory_space<vmem>>, %arg6: memref<16x1xf32, #tpu.memory_space<vmem>>, %arg7: memref<512x2xbf16, #tpu.memory_space<vmem>>, %arg8: memref<10x16xbf16, #tpu.memory_space<vmem>>, %arg9: memref<10x1xf32, #tpu.memory_space<vmem>>, %arg10: memref<10x2xf32, #tpu.memory_space<vmem>>, %arg11: memref<36x512xf32, #tpu.memory_space<vmem>>, %arg12: memref<72x512xf32, #tpu.memory_space<vmem>>) attributes {dimension_semantics = [#tpu.dimension_semantics<arbitrary>], iteration_bounds = array<i64: 1>, scalar_prefetch = 0 : i64, scratch_operands = 2 : i64, tpu.core_type = #tpu.core_type<tc>, window_params = [{pipeline_mode = #tpu.pipeline_mode<synchronous>, transform_indices = @transform_0, window_bounds = array<i64: 4, 512>}, {pipeline_mode = #tpu.pipeline_mode<synchronous>, transform_indices = @transform_1, window_bounds = array<i64: 9, 512>}, {pipeline_mode = #tpu.pipeline_mode<synchronous>, transform_indices = @transform_2, window_bounds = array<i64: 8, 36>}, {pipeline_mode = #tpu.pipeline_mode<synchronous>, transform_indices = @transform_3, window_bounds = array<i64: 8, 1>}, {pipeline_mode = #tpu.pipeline_mode<synchronous>, transform_indices = @transform_4, window_bounds = array<i64: 16, 72>}, {pipeline_mode = #tpu.pipeline_mode<synchronous>, transform_indices = @transform_5, window_bounds = array<i64: 16, 1>}, {pipeline_mode = #tpu.pipeline_mode<synchronous>, transform_indices = @transform_6, window_bounds = array<i64: 512, 2>}, {pipeline_mode = #tpu.pipeline_mode<synchronous>, transform_indices = @transform_7, window_bounds = array<i64: 10, 16>}, {pipeline_mode = #tpu.pipeline_mode<synchronous>, transform_indices = @transform_8, window_bounds = array<i64: 10, 1>}, {pipeline_mode = #tpu.pipeline_mode<synchronous>, transform_indices = @transform_9, window_bounds = array<i64: 10, 2>}]} {
    %c0 = arith.constant 0 : index
    %c0_0 = arith.constant 0 : index
    %0 = vector.load %arg1[%c0, %c0_0] : memref<4x512xf32, #tpu.memory_space<vmem>>, vector<4x512xf32>
    %c17_i32 = arith.constant 17 : i32
    %1 = tpu.dynamic_rotate %0 by %c17_i32 dim 1 : vector<4x512xf32>, i32 -> vector<4x512xf32>
    %c0_1 = arith.constant 0 : index
    %c0_2 = arith.constant 0 : index
    %2 = vector.load %arg2[%c0_1, %c0_2] : memref<9x512xf32, #tpu.memory_space<vmem>>, vector<1x512xf32>
    %3 = vector.broadcast %2 : vector<1x512xf32> to vector<4x512xf32>
    %4 = arith.mulf %1, %3 : vector<4x512xf32>
    %c0_3 = arith.constant 0 : index
    %c0_4 = arith.constant 0 : index
    %5 = vector.load %arg11[%c0_3, %c0_4] : memref<36x512xf32, #tpu.memory_space<vmem>>, vector<4x512xf32>
    tpu.vector_store %arg11[%c0_3, %c0_4], %4 {strides = array<i32>} : memref<36x512xf32, #tpu.memory_space<vmem>>, vector<4x512xf32>,
    %c16_i32 = arith.constant 16 : i32
    %6 = tpu.dynamic_rotate %0 by %c16_i32 dim 1 : vector<4x512xf32>, i32 -> vector<4x512xf32>
    %c1 = arith.constant 1 : index
    %c0_5 = arith.constant 0 : index
    %7 = vector.load %arg2[%c1, %c0_5] : memref<9x512xf32, #tpu.memory_space<vmem>>, vector<1x512xf32>
    %8 = vector.broadcast %7 : vector<1x512xf32> to vector<4x512xf32>
    %9 = arith.mulf %6, %8 : vector<4x512xf32>
    %c4 = arith.constant 4 : index
    %c0_6 = arith.constant 0 : index
    %10 = vector.load %arg11[%c4, %c0_6] : memref<36x512xf32, #tpu.memory_space<vmem>>, vector<4x512xf32>
    tpu.vector_store %arg11[%c4, %c0_6], %9 {strides = array<i32>} : memref<36x512xf32, #tpu.memory_space<vmem>>, vector<4x512xf32>,
    %c15_i32 = arith.constant 15 : i32
    %11 = tpu.dynamic_rotate %0 by %c15_i32 dim 1 : vector<4x512xf32>, i32 -> vector<4x512xf32>
    %c2 = arith.constant 2 : index
    %c0_7 = arith.constant 0 : index
    %12 = vector.load %arg2[%c2, %c0_7] : memref<9x512xf32, #tpu.memory_space<vmem>>, vector<1x512xf32>
    %13 = vector.broadcast %12 : vector<1x512xf32> to vector<4x512xf32>
    %14 = arith.mulf %11, %13 : vector<4x512xf32>
    %c8 = arith.constant 8 : index
    %c0_8 = arith.constant 0 : index
    %15 = vector.load %arg11[%c8, %c0_8] : memref<36x512xf32, #tpu.memory_space<vmem>>, vector<4x512xf32>
    tpu.vector_store %arg11[%c8, %c0_8], %14 {strides = array<i32>} : memref<36x512xf32, #tpu.memory_space<vmem>>, vector<4x512xf32>,
    %c1_i32 = arith.constant 1 : i32
    %16 = tpu.dynamic_rotate %0 by %c1_i32 dim 1 : vector<4x512xf32>, i32 -> vector<4x512xf32>
    %c3 = arith.constant 3 : index
    %c0_9 = arith.constant 0 : index
    %17 = vector.load %arg2[%c3, %c0_9] : memref<9x512xf32, #tpu.memory_space<vmem>>, vector<1x512xf32>
    %18 = vector.broadcast %17 : vector<1x512xf32> to vector<4x512xf32>
    %19 = arith.mulf %16, %18 : vector<4x512xf32>
    %c12 = arith.constant 12 : index
    %c0_10 = arith.constant 0 : index
    %20 = vector.load %arg11[%c12, %c0_10] : memref<36x512xf32, #tpu.memory_space<vmem>>, vector<4x512xf32>
    tpu.vector_store %arg11[%c12, %c0_10], %19 {strides = array<i32>} : memref<36x512xf32, #tpu.memory_space<vmem>>, vector<4x512xf32>,
    %c0_i32 = arith.constant 0 : i32
    %21 = tpu.dynamic_rotate %0 by %c0_i32 dim 1 : vector<4x512xf32>, i32 -> vector<4x512xf32>
    %c4_11 = arith.constant 4 : index
    %c0_12 = arith.constant 0 : index
    %22 = vector.load %arg2[%c4_11, %c0_12] : memref<9x512xf32, #tpu.memory_space<vmem>>, vector<1x512xf32>
    %23 = vector.broadcast %22 : vector<1x512xf32> to vector<4x512xf32>
    %24 = arith.mulf %21, %23 : vector<4x512xf32>
    %c16 = arith.constant 16 : index
    %c0_13 = arith.constant 0 : index
    %25 = vector.load %arg11[%c16, %c0_13] : memref<36x512xf32, #tpu.memory_space<vmem>>, vector<4x512xf32>
    tpu.vector_store %arg11[%c16, %c0_13], %24 {strides = array<i32>} : memref<36x512xf32, #tpu.memory_space<vmem>>, vector<4x512xf32>,
    %c511_i32 = arith.constant 511 : i32
    %26 = tpu.dynamic_rotate %0 by %c511_i32 dim 1 : vector<4x512xf32>, i32 -> vector<4x512xf32>
    %c5 = arith.constant 5 : index
    %c0_14 = arith.constant 0 : index
    %27 = vector.load %arg2[%c5, %c0_14] : memref<9x512xf32, #tpu.memory_space<vmem>>, vector<1x512xf32>
    %28 = vector.broadcast %27 : vector<1x512xf32> to vector<4x512xf32>
    %29 = arith.mulf %26, %28 : vector<4x512xf32>
    %c20 = arith.constant 20 : index
    %c0_15 = arith.constant 0 : index
    %30 = vector.load %arg11[%c20, %c0_15] : memref<36x512xf32, #tpu.memory_space<vmem>>, vector<4x512xf32>
    tpu.vector_store %arg11[%c20, %c0_15], %29 {strides = array<i32>} : memref<36x512xf32, #tpu.memory_space<vmem>>, vector<4x512xf32>,
    %c497_i32 = arith.constant 497 : i32
    %31 = tpu.dynamic_rotate %0 by %c497_i32 dim 1 : vector<4x512xf32>, i32 -> vector<4x512xf32>
    %c6 = arith.constant 6 : index
    %c0_16 = arith.constant 0 : index
    %32 = vector.load %arg2[%c6, %c0_16] : memref<9x512xf32, #tpu.memory_space<vmem>>, vector<1x512xf32>
    %33 = vector.broadcast %32 : vector<1x512xf32> to vector<4x512xf32>
    %34 = arith.mulf %31, %33 : vector<4x512xf32>
    %c24 = arith.constant 24 : index
    %c0_17 = arith.constant 0 : index
    %35 = vector.load %arg11[%c24, %c0_17] : memref<36x512xf32, #tpu.memory_space<vmem>>, vector<4x512xf32>
    tpu.vector_store %arg11[%c24, %c0_17], %34 {strides = array<i32>} : memref<36x512xf32, #tpu.memory_space<vmem>>, vector<4x512xf32>,
    %c496_i32 = arith.constant 496 : i32
    %36 = tpu.dynamic_rotate %0 by %c496_i32 dim 1 : vector<4x512xf32>, i32 -> vector<4x512xf32>
    %c7 = arith.constant 7 : index
    %c0_18 = arith.constant 0 : index
    %37 = vector.load %arg2[%c7, %c0_18] : memref<9x512xf32, #tpu.memory_space<vmem>>, vector<1x512xf32>
    %38 = vector.broadcast %37 : vector<1x512xf32> to vector<4x512xf32>
    %39 = arith.mulf %36, %38 : vector<4x512xf32>
    %c28 = arith.constant 28 : index
    %c0_19 = arith.constant 0 : index
    %40 = vector.load %arg11[%c28, %c0_19] : memref<36x512xf32, #tpu.memory_space<vmem>>, vector<4x512xf32>
    tpu.vector_store %arg11[%c28, %c0_19], %39 {strides = array<i32>} : memref<36x512xf32, #tpu.memory_space<vmem>>, vector<4x512xf32>,
    %c495_i32 = arith.constant 495 : i32
    %41 = tpu.dynamic_rotate %0 by %c495_i32 dim 1 : vector<4x512xf32>, i32 -> vector<4x512xf32>
    %c8_20 = arith.constant 8 : index
    %c0_21 = arith.constant 0 : index
    %42 = vector.load %arg2[%c8_20, %c0_21] : memref<9x512xf32, #tpu.memory_space<vmem>>, vector<1x512xf32>
    %43 = vector.broadcast %42 : vector<1x512xf32> to vector<4x512xf32>
    %44 = arith.mulf %41, %43 : vector<4x512xf32>
    %c32 = arith.constant 32 : index
    %c0_22 = arith.constant 0 : index
    %45 = vector.load %arg11[%c32, %c0_22] : memref<36x512xf32, #tpu.memory_space<vmem>>, vector<4x512xf32>
    tpu.vector_store %arg11[%c32, %c0_22], %44 {strides = array<i32>} : memref<36x512xf32, #tpu.memory_space<vmem>>, vector<4x512xf32>,
    %c0_23 = arith.constant 0 : index
    %c0_24 = arith.constant 0 : index
    %46 = vector.load %arg3[%c0_23, %c0_24] : memref<8x36xbf16, #tpu.memory_space<vmem>>, vector<8x36xbf16>
    %c0_25 = arith.constant 0 : index
    %c0_26 = arith.constant 0 : index
    %47 = vector.load %arg11[%c0_25, %c0_26] : memref<36x512xf32, #tpu.memory_space<vmem>>, vector<36x512xf32>
    %48 = arith.truncf %47 : vector<36x512xf32> to vector<36x512xbf16>
    %cst = arith.constant dense<0.000000e+00> : vector<8x512xf32>
    %49 = tpu.matmul %46, %48, %cst {dimension_numbers = #tpu.dot_dimension_numbers<[1], [0], [0], [1], [0, 0, 1, 1], [], []>} : vector<8x36xbf16>, vector<36x512xbf16>, vector<8x512xf32> -> vector<8x512xf32>
    %c0_27 = arith.constant 0 : index
    %c0_28 = arith.constant 0 : index
    %50 = vector.load %arg4[%c0_27, %c0_28] : memref<8x1xf32, #tpu.memory_space<vmem>>, vector<8x1xf32>
    %51 = vector.broadcast %50 : vector<8x1xf32> to vector<8x512xf32>
    %52 = arith.addf %49, %51 : vector<8x512xf32>
    %cst_29 = arith.constant 0.000000e+00 : f32
    %53 = vector.broadcast %cst_29 : f32 to vector<8x512xf32>
    %54 = arith.maximumf %52, %53 : vector<8x512xf32>
    %c17_i32_30 = arith.constant 17 : i32
    %55 = tpu.dynamic_rotate %54 by %c17_i32_30 dim 1 : vector<8x512xf32>, i32 -> vector<8x512xf32>
    %c0_31 = arith.constant 0 : index
    %c0_32 = arith.constant 0 : index
    %56 = vector.load %arg2[%c0_31, %c0_32] : memref<9x512xf32, #tpu.memory_space<vmem>>, vector<1x512xf32>
    %57 = vector.broadcast %56 : vector<1x512xf32> to vector<8x512xf32>
    %58 = arith.mulf %55, %57 : vector<8x512xf32>
    %c0_33 = arith.constant 0 : index
    %c0_34 = arith.constant 0 : index
    %59 = vector.load %arg12[%c0_33, %c0_34] : memref<72x512xf32, #tpu.memory_space<vmem>>, vector<8x512xf32>
    tpu.vector_store %arg12[%c0_33, %c0_34], %58 {strides = array<i32>} : memref<72x512xf32, #tpu.memory_space<vmem>>, vector<8x512xf32>,
    %c16_i32_35 = arith.constant 16 : i32
    %60 = tpu.dynamic_rotate %54 by %c16_i32_35 dim 1 : vector<8x512xf32>, i32 -> vector<8x512xf32>
    %c1_36 = arith.constant 1 : index
    %c0_37 = arith.constant 0 : index
    %61 = vector.load %arg2[%c1_36, %c0_37] : memref<9x512xf32, #tpu.memory_space<vmem>>, vector<1x512xf32>
    %62 = vector.broadcast %61 : vector<1x512xf32> to vector<8x512xf32>
    %63 = arith.mulf %60, %62 : vector<8x512xf32>
    %c8_38 = arith.constant 8 : index
    %c0_39 = arith.constant 0 : index
    %64 = vector.load %arg12[%c8_38, %c0_39] : memref<72x512xf32, #tpu.memory_space<vmem>>, vector<8x512xf32>
    tpu.vector_store %arg12[%c8_38, %c0_39], %63 {strides = array<i32>} : memref<72x512xf32, #tpu.memory_space<vmem>>, vector<8x512xf32>,
    %c15_i32_40 = arith.constant 15 : i32
    %65 = tpu.dynamic_rotate %54 by %c15_i32_40 dim 1 : vector<8x512xf32>, i32 -> vector<8x512xf32>
    %c2_41 = arith.constant 2 : index
    %c0_42 = arith.constant 0 : index
    %66 = vector.load %arg2[%c2_41, %c0_42] : memref<9x512xf32, #tpu.memory_space<vmem>>, vector<1x512xf32>
    %67 = vector.broadcast %66 : vector<1x512xf32> to vector<8x512xf32>
    %68 = arith.mulf %65, %67 : vector<8x512xf32>
    %c16_43 = arith.constant 16 : index
    %c0_44 = arith.constant 0 : index
    %69 = vector.load %arg12[%c16_43, %c0_44] : memref<72x512xf32, #tpu.memory_space<vmem>>, vector<8x512xf32>
    tpu.vector_store %arg12[%c16_43, %c0_44], %68 {strides = array<i32>} : memref<72x512xf32, #tpu.memory_space<vmem>>, vector<8x512xf32>,
    %c1_i32_45 = arith.constant 1 : i32
    %70 = tpu.dynamic_rotate %54 by %c1_i32_45 dim 1 : vector<8x512xf32>, i32 -> vector<8x512xf32>
    %c3_46 = arith.constant 3 : index
    %c0_47 = arith.constant 0 : index
    %71 = vector.load %arg2[%c3_46, %c0_47] : memref<9x512xf32, #tpu.memory_space<vmem>>, vector<1x512xf32>
    %72 = vector.broadcast %71 : vector<1x512xf32> to vector<8x512xf32>
    %73 = arith.mulf %70, %72 : vector<8x512xf32>
    %c24_48 = arith.constant 24 : index
    %c0_49 = arith.constant 0 : index
    %74 = vector.load %arg12[%c24_48, %c0_49] : memref<72x512xf32, #tpu.memory_space<vmem>>, vector<8x512xf32>
    tpu.vector_store %arg12[%c24_48, %c0_49], %73 {strides = array<i32>} : memref<72x512xf32, #tpu.memory_space<vmem>>, vector<8x512xf32>,
    %c0_i32_50 = arith.constant 0 : i32
    %75 = tpu.dynamic_rotate %54 by %c0_i32_50 dim 1 : vector<8x512xf32>, i32 -> vector<8x512xf32>
    %c4_51 = arith.constant 4 : index
    %c0_52 = arith.constant 0 : index
    %76 = vector.load %arg2[%c4_51, %c0_52] : memref<9x512xf32, #tpu.memory_space<vmem>>, vector<1x512xf32>
    %77 = vector.broadcast %76 : vector<1x512xf32> to vector<8x512xf32>
    %78 = arith.mulf %75, %77 : vector<8x512xf32>
    %c32_53 = arith.constant 32 : index
    %c0_54 = arith.constant 0 : index
    %79 = vector.load %arg12[%c32_53, %c0_54] : memref<72x512xf32, #tpu.memory_space<vmem>>, vector<8x512xf32>
    tpu.vector_store %arg12[%c32_53, %c0_54], %78 {strides = array<i32>} : memref<72x512xf32, #tpu.memory_space<vmem>>, vector<8x512xf32>,
    %c511_i32_55 = arith.constant 511 : i32
    %80 = tpu.dynamic_rotate %54 by %c511_i32_55 dim 1 : vector<8x512xf32>, i32 -> vector<8x512xf32>
    %c5_56 = arith.constant 5 : index
    %c0_57 = arith.constant 0 : index
    %81 = vector.load %arg2[%c5_56, %c0_57] : memref<9x512xf32, #tpu.memory_space<vmem>>, vector<1x512xf32>
    %82 = vector.broadcast %81 : vector<1x512xf32> to vector<8x512xf32>
    %83 = arith.mulf %80, %82 : vector<8x512xf32>
    %c40 = arith.constant 40 : index
    %c0_58 = arith.constant 0 : index
    %84 = vector.load %arg12[%c40, %c0_58] : memref<72x512xf32, #tpu.memory_space<vmem>>, vector<8x512xf32>
    tpu.vector_store %arg12[%c40, %c0_58], %83 {strides = array<i32>} : memref<72x512xf32, #tpu.memory_space<vmem>>, vector<8x512xf32>,
    %c497_i32_59 = arith.constant 497 : i32
    %85 = tpu.dynamic_rotate %54 by %c497_i32_59 dim 1 : vector<8x512xf32>, i32 -> vector<8x512xf32>
    %c6_60 = arith.constant 6 : index
    %c0_61 = arith.constant 0 : index
    %86 = vector.load %arg2[%c6_60, %c0_61] : memref<9x512xf32, #tpu.memory_space<vmem>>, vector<1x512xf32>
    %87 = vector.broadcast %86 : vector<1x512xf32> to vector<8x512xf32>
    %88 = arith.mulf %85, %87 : vector<8x512xf32>
    %c48 = arith.constant 48 : index
    %c0_62 = arith.constant 0 : index
    %89 = vector.load %arg12[%c48, %c0_62] : memref<72x512xf32, #tpu.memory_space<vmem>>, vector<8x512xf32>
    tpu.vector_store %arg12[%c48, %c0_62], %88 {strides = array<i32>} : memref<72x512xf32, #tpu.memory_space<vmem>>, vector<8x512xf32>,
    %c496_i32_63 = arith.constant 496 : i32
    %90 = tpu.dynamic_rotate %54 by %c496_i32_63 dim 1 : vector<8x512xf32>, i32 -> vector<8x512xf32>
    %c7_64 = arith.constant 7 : index
    %c0_65 = arith.constant 0 : index
    %91 = vector.load %arg2[%c7_64, %c0_65] : memref<9x512xf32, #tpu.memory_space<vmem>>, vector<1x512xf32>
    %92 = vector.broadcast %91 : vector<1x512xf32> to vector<8x512xf32>
    %93 = arith.mulf %90, %92 : vector<8x512xf32>
    %c56 = arith.constant 56 : index
    %c0_66 = arith.constant 0 : index
    %94 = vector.load %arg12[%c56, %c0_66] : memref<72x512xf32, #tpu.memory_space<vmem>>, vector<8x512xf32>
    tpu.vector_store %arg12[%c56, %c0_66], %93 {strides = array<i32>} : memref<72x512xf32, #tpu.memory_space<vmem>>, vector<8x512xf32>,
    %c495_i32_67 = arith.constant 495 : i32
    %95 = tpu.dynamic_rotate %54 by %c495_i32_67 dim 1 : vector<8x512xf32>, i32 -> vector<8x512xf32>
    %c8_68 = arith.constant 8 : index
    %c0_69 = arith.constant 0 : index
    %96 = vector.load %arg2[%c8_68, %c0_69] : memref<9x512xf32, #tpu.memory_space<vmem>>, vector<1x512xf32>
    %97 = vector.broadcast %96 : vector<1x512xf32> to vector<8x512xf32>
    %98 = arith.mulf %95, %97 : vector<8x512xf32>
    %c64 = arith.constant 64 : index
    %c0_70 = arith.constant 0 : index
    %99 = vector.load %arg12[%c64, %c0_70] : memref<72x512xf32, #tpu.memory_space<vmem>>, vector<8x512xf32>
    tpu.vector_store %arg12[%c64, %c0_70], %98 {strides = array<i32>} : memref<72x512xf32, #tpu.memory_space<vmem>>, vector<8x512xf32>,
    %c0_71 = arith.constant 0 : index
    %c0_72 = arith.constant 0 : index
    %100 = vector.load %arg5[%c0_71, %c0_72] : memref<16x72xbf16, #tpu.memory_space<vmem>>, vector<16x72xbf16>
    %c0_73 = arith.constant 0 : index
    %c0_74 = arith.constant 0 : index
    %101 = vector.load %arg12[%c0_73, %c0_74] : memref<72x512xf32, #tpu.memory_space<vmem>>, vector<72x512xf32>
    %102 = arith.truncf %101 : vector<72x512xf32> to vector<72x512xbf16>
    %cst_75 = arith.constant dense<0.000000e+00> : vector<16x512xf32>
    %103 = tpu.matmul %100, %102, %cst_75 {dimension_numbers = #tpu.dot_dimension_numbers<[1], [0], [0], [1], [0, 0, 1, 1], [], []>} : vector<16x72xbf16>, vector<72x512xbf16>, vector<16x512xf32> -> vector<16x512xf32>
    %c0_76 = arith.constant 0 : index
    %c0_77 = arith.constant 0 : index
    %104 = vector.load %arg6[%c0_76, %c0_77] : memref<16x1xf32, #tpu.memory_space<vmem>>, vector<16x1xf32>
    %105 = vector.broadcast %104 : vector<16x1xf32> to vector<16x512xf32>
    %106 = arith.addf %103, %105 : vector<16x512xf32>
    %cst_78 = arith.constant 0.000000e+00 : f32
    %107 = vector.broadcast %cst_78 : f32 to vector<16x512xf32>
    %108 = arith.maximumf %106, %107 : vector<16x512xf32>
    %109 = arith.truncf %108 : vector<16x512xf32> to vector<16x512xbf16>
    %c0_79 = arith.constant 0 : index
    %c0_80 = arith.constant 0 : index
    %110 = vector.load %arg7[%c0_79, %c0_80] : memref<512x2xbf16, #tpu.memory_space<vmem>>, vector<512x2xbf16>
    %cst_81 = arith.constant dense<0.000000e+00> : vector<16x2xf32>
    %111 = tpu.matmul %109, %110, %cst_81 {dimension_numbers = #tpu.dot_dimension_numbers<[1], [0], [0], [1], [0, 0, 1, 1], [], []>} : vector<16x512xbf16>, vector<512x2xbf16>, vector<16x2xf32> -> vector<16x2xf32>
    %c0_82 = arith.constant 0 : index
    %c0_83 = arith.constant 0 : index
    %112 = vector.load %arg8[%c0_82, %c0_83] : memref<10x16xbf16, #tpu.memory_space<vmem>>, vector<10x16xbf16>
    %113 = arith.truncf %111 : vector<16x2xf32> to vector<16x2xbf16>
    %cst_84 = arith.constant dense<0.000000e+00> : vector<10x2xf32>
    %114 = tpu.matmul %112, %113, %cst_84 {dimension_numbers = #tpu.dot_dimension_numbers<[1], [0], [0], [1], [0, 0, 1, 1], [], []>} : vector<10x16xbf16>, vector<16x2xbf16>, vector<10x2xf32> -> vector<10x2xf32>
    %c0_85 = arith.constant 0 : index
    %c0_86 = arith.constant 0 : index
    %115 = vector.load %arg9[%c0_85, %c0_86] : memref<10x1xf32, #tpu.memory_space<vmem>>, vector<10x1xf32>
    %116 = vector.broadcast %115 : vector<10x1xf32> to vector<10x2xf32>
    %117 = arith.addf %114, %116 : vector<10x2xf32>
    %c0_87 = arith.constant 0 : index
    %c0_88 = arith.constant 0 : index
    %118 = vector.load %arg10[%c0_87, %c0_88] : memref<10x2xf32, #tpu.memory_space<vmem>>, vector<10x2xf32>
    tpu.vector_store %arg10[%c0_87, %c0_88], %117 {strides = array<i32>} : memref<10x2xf32, #tpu.memory_space<vmem>>, vector<10x2xf32>,
    return
  }
  func.func @transform_0(%arg0: i32) -> (i32, i32) {
    %c0_i32 = arith.constant 0 : i32
    %c0_i32_0 = arith.constant 0 : i32
    %c0_i32_1 = arith.constant 0 : i32
    return %c0_i32, %c0_i32_0 : i32, i32
  }
  func.func @transform_1(%arg0: i32) -> (i32, i32) {
    %c0_i32 = arith.constant 0 : i32
    %c0_i32_0 = arith.constant 0 : i32
    %c0_i32_1 = arith.constant 0 : i32
    return %c0_i32, %c0_i32_0 : i32, i32
  }
  func.func @transform_2(%arg0: i32) -> (i32, i32) {
    %c0_i32 = arith.constant 0 : i32
    %c0_i32_0 = arith.constant 0 : i32
    %c0_i32_1 = arith.constant 0 : i32
    return %c0_i32, %c0_i32_0 : i32, i32
  }
  func.func @transform_3(%arg0: i32) -> (i32, i32) {
    %c0_i32 = arith.constant 0 : i32
    %c0_i32_0 = arith.constant 0 : i32
    %c0_i32_1 = arith.constant 0 : i32
    return %c0_i32, %c0_i32_0 : i32, i32
  }
  func.func @transform_4(%arg0: i32) -> (i32, i32) {
    %c0_i32 = arith.constant 0 : i32
    %c0_i32_0 = arith.constant 0 : i32
    %c0_i32_1 = arith.constant 0 : i32
    return %c0_i32, %c0_i32_0 : i32, i32
  }
  func.func @transform_5(%arg0: i32) -> (i32, i32) {
    %c0_i32 = arith.constant 0 : i32
    %c0_i32_0 = arith.constant 0 : i32
    %c0_i32_1 = arith.constant 0 : i32
    return %c0_i32, %c0_i32_0 : i32, i32
  }
  func.func @transform_6(%arg0: i32) -> (i32, i32) {
    %c0_i32 = arith.constant 0 : i32
    %c0_i32_0 = arith.constant 0 : i32
    %c0_i32_1 = arith.constant 0 : i32
    return %c0_i32, %c0_i32_0 : i32, i32
  }
  func.func @transform_7(%arg0: i32) -> (i32, i32) {
    %c0_i32 = arith.constant 0 : i32
    %c0_i32_0 = arith.constant 0 : i32
    %c0_i32_1 = arith.constant 0 : i32
    return %c0_i32, %c0_i32_0 : i32, i32
  }
  func.func @transform_8(%arg0: i32) -> (i32, i32) {
    %c0_i32 = arith.constant 0 : i32
    %c0_i32_0 = arith.constant 0 : i32
    %c0_i32_1 = arith.constant 0 : i32
    return %c0_i32, %c0_i32_0 : i32, i32
  }
  func.func @transform_9(%arg0: i32) -> (i32, i32) {
    %c0_i32 = arith.constant 0 : i32
    %c0_i32_0 = arith.constant 0 : i32
    %c0_i32_1 = arith.constant 0 : i32
    return %c0_i32, %c0_i32_0 : i32, i32
  }
}

</mosaic_0001>

<llo_original>
// kernel: finetune_net_forward.1
$region0: #{finetune_net_forward.1}
  #allocation0 [shape = 'u32[]', space=smem, size = 0x4, offset = 0x4, fixed_abs, tag = 'smem constant byte address 0x4 - core index']
  #allocation1 [shape = 'u32[144,128]{1,0:T(1,128)}', space=vmem, size = 0x12000, scoped, tag = 'internal scratch']
  #allocation2 [shape = 'f32[36,512]{1,0:T(8,128)}', space=vmem, size = 0x14000, scoped, tag = 'scratch operand']
  #allocation3 [shape = 'f32[72,512]{1,0:T(8,128)}', space=vmem, size = 0x24000, scoped, tag = 'scratch operand']
  %s0 = inlined_call_operand.vmem [shape: f32[4,512], index: 0, kind: input, shape index: {}]
  %s1 = inlined_call_operand.vmem [shape: f32[9,512], index: 1, kind: input, shape index: {}]
  %s2 = inlined_call_operand.vmem [shape: bf16[8,36], index: 2, kind: input, shape index: {}]
  %s3 = inlined_call_operand.vmem [shape: f32[8,1], index: 3, kind: input, shape index: {}]
  %s4 = inlined_call_operand.vmem [shape: bf16[16,72], index: 4, kind: input, shape index: {}]
  %s5 = inlined_call_operand.vmem [shape: f32[16,1], index: 5, kind: input, shape index: {}]
  %s6 = inlined_call_operand.vmem [shape: bf16[512,2], index: 6, kind: input, shape index: {}]
  %s7 = inlined_call_operand.vmem [shape: bf16[10,16], index: 7, kind: input, shape index: {}]
  %s8 = inlined_call_operand.vmem [shape: f32[10,1], index: 8, kind: input, shape index: {}]
  %s9 = inlined_call_operand.vmem [shape: f32[10,2], index: 9, kind: output, shape index: {}]
  %s10 = sld [smem:[#allocation0]]
  $region46: #{finetune_net_forward.1} parent=0
    _
  %s12 = ssub.s32 1, %s10
  %s13 = scalar_select 0, %s12, %s10
  // Predicated region
  $region2: #{finetune_net_forward.1} parent=0 // pred_check
    _
  $region3: #{finetune_net_forward.1} parent=0 // pred_check_branch
    %15 = sbr.rel (0) target = $region5
  $region4: #{finetune_net_forward.1} parent=0 // pred_region
    _
  $region5: #{finetune_net_forward.1} parent=0 // pred_fallthru
    _
  // Predicated region
  $region6: #{finetune_net_forward.1} parent=0 // pred_check
    _
  $region7: #{finetune_net_forward.1} parent=0 // pred_check_branch
    %17 = sbr.rel (0) target = $region9
  $region8: #{finetune_net_forward.1} parent=0 // pred_region
    _
  $region9: #{finetune_net_forward.1} parent=0 // pred_fallthru
    _
  // Predicated region
  $region10: #{finetune_net_forward.1} parent=0 // pred_check
    _
  $region11: #{finetune_net_forward.1} parent=0 // pred_check_branch
    %19 = sbr.rel (0) target = $region13
  $region12: #{finetune_net_forward.1} parent=0 // pred_region
    _
  $region13: #{finetune_net_forward.1} parent=0 // pred_fallthru
    _
  // Predicated region
  $region14: #{finetune_net_forward.1} parent=0 // pred_check
    _
  $region15: #{finetune_net_forward.1} parent=0 // pred_check_branch
    %21 = sbr.rel (0) target = $region17
  $region16: #{finetune_net_forward.1} parent=0 // pred_region
    _
  $region17: #{finetune_net_forward.1} parent=0 // pred_fallthru
    _
  // Predicated region
  $region18: #{finetune_net_forward.1} parent=0 // pred_check
    _
  $region19: #{finetune_net_forward.1} parent=0 // pred_check_branch
    %23 = sbr.rel (0) target = $region21
  $region20: #{finetune_net_forward.1} parent=0 // pred_region
    _
  $region21: #{finetune_net_forward.1} parent=0 // pred_fallthru
    _
  // Predicated region
  $region22: #{finetune_net_forward.1} parent=0 // pred_check
    _
  $region23: #{finetune_net_forward.1} parent=0 // pred_check_branch
    %25 = sbr.rel (0) target = $region25
  $region24: #{finetune_net_forward.1} parent=0 // pred_region
    _
  $region25: #{finetune_net_forward.1} parent=0 // pred_fallthru
    _
  // Predicated region
  $region26: #{finetune_net_forward.1} parent=0 // pred_check
    _
  $region27: #{finetune_net_forward.1} parent=0 // pred_check_branch
    %27 = sbr.rel (0) target = $region29
  $region28: #{finetune_net_forward.1} parent=0 // pred_region
    _
  $region29: #{finetune_net_forward.1} parent=0 // pred_fallthru
    _
  // Predicated region
  $region30: #{finetune_net_forward.1} parent=0 // pred_check
    _
  $region31: #{finetune_net_forward.1} parent=0 // pred_check_branch
    %29 = sbr.rel (0) target = $region33
  $region32: #{finetune_net_forward.1} parent=0 // pred_region
    _
  $region33: #{finetune_net_forward.1} parent=0 // pred_fallthru
    _
  // Predicated region
  $region34: #{finetune_net_forward.1} parent=0 // pred_check
    _
  $region35: #{finetune_net_forward.1} parent=0 // pred_check_branch
    %31 = sbr.rel (0) target = $region37
  $region36: #{finetune_net_forward.1} parent=0 // pred_region
    _
  $region37: #{finetune_net_forward.1} parent=0 // pred_fallthru
    _
  %v33 = vld [vmem:[%s0] sm:$0xff]
  %v34 = vld [vmem:[%s0 + $0x8] sm:$0xff]
  %v37 = vcombine.high %v33, %v33
  %v38 = vcombine.high %v34, %v34
  %41 = vrot.lane.b32.xlu0 %v33, 17
  %v42 = vpop.permute.xlu0 %41
  %43 = vrot.lane.b32.xlu0 %v37, 17
  %v44 = vpop.permute.xlu0 %43
  %45 = vrot.lane.b32.xlu0 %v34, 17
  %v46 = vpop.permute.xlu0 %45
  %47 = vrot.lane.b32.xlu0 %v38, 17
  %v48 = vpop.permute.xlu0 %47
  %v49 = vlaneseq
  %v50 = vand.u32 %v49, 127
  %vm51 = vcmp.lt.s32.totalorder %v50, 17
  %v52 = vsel %vm51, %v46, %v48
  %v53 = vsel %vm51, %v44, %v46
  %v54 = vsel %vm51, %v42, %v44
  %v55 = vsel %vm51, %v48, %v42
  %v56 = vld [vmem:[%s1] ss:$8 sm:$0xf]
  %v58 = vlaneseq
  %v59 = vshrl.u32 %v58, 7
  %v60 = vsub.s32 0, %v59
  %v61 = vrot.slane %v56, %v60
  %v62 = vlaneseq
  %v63 = vshrl.u32 %v62, 7
  %v64 = vsub.s32 1, %v63
  %v65 = vrot.slane %v56, %v64
  %v66 = vlaneseq
  %v67 = vshrl.u32 %v66, 7
  %v68 = vsub.s32 2, %v67
  %v69 = vrot.slane %v56, %v68
  %v70 = vlaneseq
  %v71 = vshrl.u32 %v70, 7
  %v72 = vsub.s32 3, %v71
  %v73 = vrot.slane %v56, %v72
  %v78 = vmul.f32 %v55, %v61
  %v79 = vmul.f32 %v54, %v65
  %v80 = vmul.f32 %v53, %v69
  %v81 = vmul.f32 %v52, %v73
  %82 = vst [vmem:[#allocation2] sm:$0xf] %v78
  %83 = vst [vmem:[#allocation2 + $0x8] sm:$0xf] %v79
  %84 = vst [vmem:[#allocation2 + $0x10] sm:$0xf] %v80
  %85 = vst [vmem:[#allocation2 + $0x18] sm:$0xf] %v81
  %86 = vrot.lane.b32.xlu0 %v33, 16
  %v87 = vpop.permute.xlu0 %86
  %88 = vrot.lane.b32.xlu0 %v37, 16
  %v89 = vpop.permute.xlu0 %88
  %90 = vrot.lane.b32.xlu0 %v34, 16
  %v91 = vpop.permute.xlu0 %90
  %92 = vrot.lane.b32.xlu0 %v38, 16
  %v93 = vpop.permute.xlu0 %92
  %vm94 = vcmp.lt.s32.totalorder %v50, 16
  %v95 = vsel %vm94, %v91, %v93
  %v96 = vsel %vm94, %v89, %v91
  %v97 = vsel %vm94, %v87, %v89
  %v98 = vsel %vm94, %v93, %v87
  %s99 = scalar_lea.vmem %s1, 1
  %v100 = vld [vmem:[%s99] ss:$8 sm:$0xf]
  %v102 = vlaneseq
  %v103 = vshrl.u32 %v102, 7
  %v104 = vsub.s32 0, %v103
  %v105 = vrot.slane %v100, %v104
  %v106 = vlaneseq
  %v107 = vshrl.u32 %v106, 7
  %v108 = vsub.s32 1, %v107
  %v109 = vrot.slane %v100, %v108
  %v110 = vlaneseq
  %v111 = vshrl.u32 %v110, 7
  %v112 = vsub.s32 2, %v111
  %v113 = vrot.slane %v100, %v112
  %v114 = vlaneseq
  %v115 = vshrl.u32 %v114, 7
  %v116 = vsub.s32 3, %v115
  %v117 = vrot.slane %v100, %v116
  %v122 = vmul.f32 %v98, %v105
  %v123 = vmul.f32 %v97, %v109
  %v124 = vmul.f32 %v96, %v113
  %v125 = vmul.f32 %v95, %v117
  %v130 = vrot.slane %v122, 4
  %v131 = vrot.slane %v123, 4
  %v132 = vrot.slane %v124, 4
  %v133 = vrot.slane %v125, 4
  %138 = vst [vmem:[#allocation2] sm:$0xf0] %v130
  %139 = vst [vmem:[#allocation2 + $0x8] sm:$0xf0] %v131
  %140 = vst [vmem:[#allocation2 + $0x10] sm:$0xf0] %v132
  %141 = vst [vmem:[#allocation2 + $0x18] sm:$0xf0] %v133
  %142 = vrot.lane.b32.xlu0 %v33, 15
  %v143 = vpop.permute.xlu0 %142
  %144 = vrot.lane.b32.xlu0 %v37, 15
  %v145 = vpop.permute.xlu0 %144
  %146 = vrot.lane.b32.xlu0 %v34, 15
  %v147 = vpop.permute.xlu0 %146
  %148 = vrot.lane.b32.xlu0 %v38, 15
  %v149 = vpop.permute.xlu0 %148
  %vm150 = vcmp.lt.s32.totalorder %v50, 15
  %v151 = vsel %vm150, %v147, %v149
  %v152 = vsel %vm150, %v145, %v147
  %v153 = vsel %vm150, %v143, %v145
  %v154 = vsel %vm150, %v149, %v143
  %s155 = scalar_lea.vmem %s1, 2
  %v156 = vld [vmem:[%s155] ss:$8 sm:$0xf]
  %v158 = vlaneseq
  %v159 = vshrl.u32 %v158, 7
  %v160 = vsub.s32 0, %v159
  %v161 = vrot.slane %v156, %v160
  %v162 = vlaneseq
  %v163 = vshrl.u32 %v162, 7
  %v164 = vsub.s32 1, %v163
  %v165 = vrot.slane %v156, %v164
  %v166 = vlaneseq
  %v167 = vshrl.u32 %v166, 7
  %v168 = vsub.s32 2, %v167
  %v169 = vrot.slane %v156, %v168
  %v170 = vlaneseq
  %v171 = vshrl.u32 %v170, 7
  %v172 = vsub.s32 3, %v171
  %v173 = vrot.slane %v156, %v172
  %v178 = vmul.f32 %v154, %v161
  %v179 = vmul.f32 %v153, %v165
  %v180 = vmul.f32 %v152, %v169
  %v181 = vmul.f32 %v151, %v173
  %182 = vst [vmem:[#allocation2 + $0x20] sm:$0xf] %v178
  %183 = vst [vmem:[#allocation2 + $0x28] sm:$0xf] %v179
  %184 = vst [vmem:[#allocation2 + $0x30] sm:$0xf] %v180
  %185 = vst [vmem:[#allocation2 + $0x38] sm:$0xf] %v181
  %186 = vrot.lane.b32.xlu0 %v33, 1
  %v187 = vpop.permute.xlu0 %186
  %188 = vrot.lane.b32.xlu0 %v37, 1
  %v189 = vpop.permute.xlu0 %188
  %190 = vrot.lane.b32.xlu0 %v34, 1
  %v191 = vpop.permute.xlu0 %190
  %192 = vrot.lane.b32.xlu0 %v38, 1
  %v193 = vpop.permute.xlu0 %192
  %vm194 = vcmp.lt.s32.totalorder %v50, 1
  %v195 = vsel %vm194, %v191, %v193
  %v196 = vsel %vm194, %v189, %v191
  %v197 = vsel %vm194, %v187, %v189
  %v198 = vsel %vm194, %v193, %v187
  %s199 = scalar_lea.vmem %s1, 3
  %v200 = vld [vmem:[%s199] ss:$8 sm:$0xf]
  %v202 = vlaneseq
  %v203 = vshrl.u32 %v202, 7
  %v204 = vsub.s32 0, %v203
  %v205 = vrot.slane %v200, %v204
  %v206 = vlaneseq
  %v207 = vshrl.u32 %v206, 7
  %v208 = vsub.s32 1, %v207
  %v209 = vrot.slane %v200, %v208
  %v210 = vlaneseq
  %v211 = vshrl.u32 %v210, 7
  %v212 = vsub.s32 2, %v211
  %v213 = vrot.slane %v200, %v212
  %v214 = vlaneseq
  %v215 = vshrl.u32 %v214, 7
  %v216 = vsub.s32 3, %v215
  %v217 = vrot.slane %v200, %v216
  %v222 = vmul.f32 %v198, %v205
  %v223 = vmul.f32 %v197, %v209
  %v224 = vmul.f32 %v196, %v213
  %v225 = vmul.f32 %v195, %v217
  %v230 = vrot.slane %v222, 4
  %v231 = vrot.slane %v223, 4
  %v232 = vrot.slane %v224, 4
  %v233 = vrot.slane %v225, 4
  %238 = vst [vmem:[#allocation2 + $0x20] sm:$0xf0] %v230
  %239 = vst [vmem:[#allocation2 + $0x28] sm:$0xf0] %v231
  %240 = vst [vmem:[#allocation2 + $0x30] sm:$0xf0] %v232
  %241 = vst [vmem:[#allocation2 + $0x38] sm:$0xf0] %v233
  %s242 = scalar_lea.vmem %s1, 4
  %v243 = vld [vmem:[%s242] ss:$8 sm:$0xf]
  %v245 = vlaneseq
  %v246 = vshrl.u32 %v245, 7
  %v247 = vsub.s32 0, %v246
  %v248 = vrot.slane %v243, %v247
  %v249 = vlaneseq
  %v250 = vshrl.u32 %v249, 7
  %v251 = vsub.s32 1, %v250
  %v252 = vrot.slane %v243, %v251
  %v253 = vlaneseq
  %v254 = vshrl.u32 %v253, 7
  %v255 = vsub.s32 2, %v254
  %v256 = vrot.slane %v243, %v255
  %v257 = vlaneseq
  %v258 = vshrl.u32 %v257, 7
  %v259 = vsub.s32 3, %v258
  %v260 = vrot.slane %v243, %v259
  %v265 = vmul.f32 %v33, %v248
  %v266 = vmul.f32 %v37, %v252
  %v267 = vmul.f32 %v34, %v256
  %v268 = vmul.f32 %v38, %v260
  %269 = vst [vmem:[#allocation2 + $0x40] sm:$0xf] %v265
  %270 = vst [vmem:[#allocation2 + $0x48] sm:$0xf] %v266
  %271 = vst [vmem:[#allocation2 + $0x50] sm:$0xf] %v267
  %272 = vst [vmem:[#allocation2 + $0x58] sm:$0xf] %v268
  %273 = vrot.lane.b32.xlu0 %v33, 127
  %v274 = vpop.permute.xlu0 %273
  %275 = vrot.lane.b32.xlu0 %v37, 127
  %v276 = vpop.permute.xlu0 %275
  %277 = vrot.lane.b32.xlu0 %v34, 127
  %v278 = vpop.permute.xlu0 %277
  %279 = vrot.lane.b32.xlu0 %v38, 127
  %v280 = vpop.permute.xlu0 %279
  %vm281 = vcmp.lt.s32.totalorder %v50, 127
  %v282 = vsel %vm281, %v278, %v280
  %v283 = vsel %vm281, %v276, %v278
  %v284 = vsel %vm281, %v274, %v276
  %v285 = vsel %vm281, %v280, %v274
  %s286 = scalar_lea.vmem %s1, 5
  %v287 = vld [vmem:[%s286] ss:$8 sm:$0xf]
  %v289 = vlaneseq
  %v290 = vshrl.u32 %v289, 7
  %v291 = vsub.s32 0, %v290
  %v292 = vrot.slane %v287, %v291
  %v293 = vlaneseq
  %v294 = vshrl.u32 %v293, 7
  %v295 = vsub.s32 1, %v294
  %v296 = vrot.slane %v287, %v295
  %v297 = vlaneseq
  %v298 = vshrl.u32 %v297, 7
  %v299 = vsub.s32 2, %v298
  %v300 = vrot.slane %v287, %v299
  %v301 = vlaneseq
  %v302 = vshrl.u32 %v301, 7
  %v303 = vsub.s32 3, %v302
  %v304 = vrot.slane %v287, %v303
  %v309 = vmul.f32 %v284, %v292
  %v310 = vmul.f32 %v283, %v296
  %v311 = vmul.f32 %v282, %v300
  %v312 = vmul.f32 %v285, %v304
  %v317 = vrot.slane %v309, 4
  %v318 = vrot.slane %v310, 4
  %v319 = vrot.slane %v311, 4
  %v320 = vrot.slane %v312, 4
  %325 = vst [vmem:[#allocation2 + $0x40] sm:$0xf0] %v317
  %326 = vst [vmem:[#allocation2 + $0x48] sm:$0xf0] %v318
  %327 = vst [vmem:[#allocation2 + $0x50] sm:$0xf0] %v319
  %328 = vst [vmem:[#allocation2 + $0x58] sm:$0xf0] %v320
  %329 = vrot.lane.b32.xlu0 %v33, 113
  %v330 = vpop.permute.xlu0 %329
  %331 = vrot.lane.b32.xlu0 %v37, 113
  %v332 = vpop.permute.xlu0 %331
  %333 = vrot.lane.b32.xlu0 %v34, 113
  %v334 = vpop.permute.xlu0 %333
  %335 = vrot.lane.b32.xlu0 %v38, 113
  %v336 = vpop.permute.xlu0 %335
  %vm337 = vcmp.lt.s32.totalorder %v50, 113
  %v338 = vsel %vm337, %v334, %v336
  %v339 = vsel %vm337, %v332, %v334
  %v340 = vsel %vm337, %v330, %v332
  %v341 = vsel %vm337, %v336, %v330
  %s342 = scalar_lea.vmem %s1, 6
  %v343 = vld [vmem:[%s342] ss:$8 sm:$0xf]
  %v345 = vlaneseq
  %v346 = vshrl.u32 %v345, 7
  %v347 = vsub.s32 0, %v346
  %v348 = vrot.slane %v343, %v347
  %v349 = vlaneseq
  %v350 = vshrl.u32 %v349, 7
  %v351 = vsub.s32 1, %v350
  %v352 = vrot.slane %v343, %v351
  %v353 = vlaneseq
  %v354 = vshrl.u32 %v353, 7
  %v355 = vsub.s32 2, %v354
  %v356 = vrot.slane %v343, %v355
  %v357 = vlaneseq
  %v358 = vshrl.u32 %v357, 7
  %v359 = vsub.s32 3, %v358
  %v360 = vrot.slane %v343, %v359
  %v365 = vmul.f32 %v340, %v348
  %v366 = vmul.f32 %v339, %v352
  %v367 = vmul.f32 %v338, %v356
  %v368 = vmul.f32 %v341, %v360
  %369 = vst [vmem:[#allocation2 + $0x60] sm:$0xf] %v365
  %370 = vst [vmem:[#allocation2 + $0x68] sm:$0xf] %v366
  %371 = vst [vmem:[#allocation2 + $0x70] sm:$0xf] %v367
  %372 = vst [vmem:[#allocation2 + $0x78] sm:$0xf] %v368
  %373 = vrot.lane.b32.xlu0 %v33, 112
  %v374 = vpop.permute.xlu0 %373
  %375 = vrot.lane.b32.xlu0 %v37, 112
  %v376 = vpop.permute.xlu0 %375
  %377 = vrot.lane.b32.xlu0 %v34, 112
  %v378 = vpop.permute.xlu0 %377
  %379 = vrot.lane.b32.xlu0 %v38, 112
  %v380 = vpop.permute.xlu0 %379
  %vm381 = vcmp.lt.s32.totalorder %v50, 112
  %v382 = vsel %vm381, %v378, %v380
  %v383 = vsel %vm381, %v376, %v378
  %v384 = vsel %vm381, %v374, %v376
  %v385 = vsel %vm381, %v380, %v374
  %s386 = scalar_lea.vmem %s1, 7
  %v387 = vld [vmem:[%s386] ss:$8 sm:$0xf]
  %v389 = vlaneseq
  %v390 = vshrl.u32 %v389, 7
  %v391 = vsub.s32 0, %v390
  %v392 = vrot.slane %v387, %v391
  %v393 = vlaneseq
  %v394 = vshrl.u32 %v393, 7
  %v395 = vsub.s32 1, %v394
  %v396 = vrot.slane %v387, %v395
  %v397 = vlaneseq
  %v398 = vshrl.u32 %v397, 7
  %v399 = vsub.s32 2, %v398
  %v400 = vrot.slane %v387, %v399
  %v401 = vlaneseq
  %v402 = vshrl.u32 %v401, 7
  %v403 = vsub.s32 3, %v402
  %v404 = vrot.slane %v387, %v403
  %v409 = vmul.f32 %v384, %v392
  %v410 = vmul.f32 %v383, %v396
  %v411 = vmul.f32 %v382, %v400
  %v412 = vmul.f32 %v385, %v404
  %v417 = vrot.slane %v409, 4
  %v418 = vrot.slane %v410, 4
  %v419 = vrot.slane %v411, 4
  %v420 = vrot.slane %v412, 4
  %425 = vst [vmem:[#allocation2 + $0x60] sm:$0xf0] %v417
  %426 = vst [vmem:[#allocation2 + $0x68] sm:$0xf0] %v418
  %427 = vst [vmem:[#allocation2 + $0x70] sm:$0xf0] %v419
  %428 = vst [vmem:[#allocation2 + $0x78] sm:$0xf0] %v420
  %429 = vrot.lane.b32.xlu0 %v33, 111
  %v430 = vpop.permute.xlu0 %429
  %431 = vrot.lane.b32.xlu0 %v37, 111
  %v432 = vpop.permute.xlu0 %431
  %433 = vrot.lane.b32.xlu0 %v34, 111
  %v434 = vpop.permute.xlu0 %433
  %435 = vrot.lane.b32.xlu0 %v38, 111
  %v436 = vpop.permute.xlu0 %435
  %vm437 = vcmp.lt.s32.totalorder %v50, 111
  %v438 = vsel %vm437, %v434, %v436
  %v439 = vsel %vm437, %v432, %v434
  %v440 = vsel %vm437, %v430, %v432
  %v441 = vsel %vm437, %v436, %v430
  %s442 = scalar_lea.vmem %s1, 32
  %v443 = vld [vmem:[%s442] ss:$8 sm:$0xf]
  %v445 = vlaneseq
  %v446 = vshrl.u32 %v445, 7
  %v447 = vsub.s32 0, %v446
  %v448 = vrot.slane %v443, %v447
  %v449 = vlaneseq
  %v450 = vshrl.u32 %v449, 7
  %v451 = vsub.s32 1, %v450
  %v452 = vrot.slane %v443, %v451
  %v453 = vlaneseq
  %v454 = vshrl.u32 %v453, 7
  %v455 = vsub.s32 2, %v454
  %v456 = vrot.slane %v443, %v455
  %v457 = vlaneseq
  %v458 = vshrl.u32 %v457, 7
  %v459 = vsub.s32 3, %v458
  %v460 = vrot.slane %v443, %v459
  %v465 = vmul.f32 %v440, %v448
  %v466 = vmul.f32 %v439, %v452
  %v467 = vmul.f32 %v438, %v456
  %v468 = vmul.f32 %v441, %v460
  %469 = vst [vmem:[#allocation2 + $0x80] sm:$0xf] %v465
  %470 = vst [vmem:[#allocation2 + $0x88] sm:$0xf] %v466
  %471 = vst [vmem:[#allocation2 + $0x90] sm:$0xf] %v467
  %472 = vst [vmem:[#allocation2 + $0x98] sm:$0xf] %v468
  %v473 = vld [vmem:[%s2] sm:$0xf]
  %v474 = vld [vmem:[#allocation2] sm:$0xff]
  %v475 = vld [vmem:[#allocation2 + $0x8] sm:$0xff]
  %v476 = vld [vmem:[#allocation2 + $0x10] sm:$0xff]
  %v477 = vld [vmem:[#allocation2 + $0x18] sm:$0xff]
  %v478 = vld [vmem:[#allocation2 + $0x20] sm:$0xff]
  %v479 = vld [vmem:[#allocation2 + $0x28] sm:$0xff]
  %v480 = vld [vmem:[#allocation2 + $0x30] sm:$0xff]
  %v481 = vld [vmem:[#allocation2 + $0x38] sm:$0xff]
  %v482 = vld [vmem:[#allocation2 + $0x40] sm:$0xff]
  %v483 = vld [vmem:[#allocation2 + $0x48] sm:$0xff]
  %v484 = vld [vmem:[#allocation2 + $0x50] sm:$0xff]
  %v485 = vld [vmem:[#allocation2 + $0x58] sm:$0xff]
  %v486 = vld [vmem:[#allocation2 + $0x60] sm:$0xff]
  %v487 = vld [vmem:[#allocation2 + $0x68] sm:$0xff]
  %v488 = vld [vmem:[#allocation2 + $0x70] sm:$0xff]
  %v489 = vld [vmem:[#allocation2 + $0x78] sm:$0xff]
  %v490 = vld [vmem:[#allocation2 + $0x80] sm:$0xf]
  %v491 = vld [vmem:[#allocation2 + $0x88] sm:$0xf]
  %v492 = vld [vmem:[#allocation2 + $0x90] sm:$0xf]
  %v493 = vld [vmem:[#allocation2 + $0x98] sm:$0xf]
  %v494 = vpack.c.bf16 %v478, %v474
  %v495 = vpack.c.bf16 %v479, %v475
  %v496 = vpack.c.bf16 %v480, %v476
  %v497 = vpack.c.bf16 %v481, %v477
  %v498 = vpack.c.bf16 %v486, %v482
  %v499 = vpack.c.bf16 %v487, %v483
  %v500 = vpack.c.bf16 %v488, %v484
  %v501 = vpack.c.bf16 %v489, %v485
  %v502 = vpack.c.bf16 %v490, %v490
  %v503 = vpack.c.bf16 %v491, %v491
  %v504 = vpack.c.bf16 %v492, %v492
  %v505 = vpack.c.bf16 %v493, %v493
  %v506 = vld [vmem:[%s3] sm:$0xff]
  %508 = vset.pattern.permute.xlu0 0
  %509 = vperm.xlu0 %508, %v506
  %v510 = vpop.permute.xlu0 %509
  %vm512 = vcmask 293888
  %v514 = vsel %vm512, %v473, 0
  %vm516 = vcmask 1041408
  %v518 = vsel %vm516, %v502, 0
  %v521 = vsel %vm516, %v503, 0
  %v524 = vsel %vm516, %v504, 0
  %v527 = vsel %vm516, %v505, 0
  %529 = vmatprep.subr.bf16.mxu0 0
  %530 = vmatpush1.bf16.msra.mxu0 0
  %531 = vmatprep.subr.bf16.mxu0 0
  %532 = vmatpush1.bf16.msra.mxu0 0
  %533 = vmatprep.subr.bf16.mxu0 0
  %534 = vmatpush1.bf16.msra.mxu0 0
  %535 = vmatprep.subr.bf16.mxu0 0
  %536 = vmatpush1.bf16.msra.mxu0 0
  %537 = vmatprep.subr.bf16.mxu0 0
  %538 = vmatpush1.bf16.msra.mxu0 0
  %539 = vmatprep.subr.bf16.mxu0 %v521
  %540 = vmatpush1.bf16.msra.mxu0 %v518
  %541 = vmatprep.subr.bf16.mxu0 %v499
  %542 = vmatpush1.bf16.msra.mxu0 %v498
  %543 = vmatprep.subr.bf16.mxu0 %v495
  %544 = vmatpush1.bf16.msra.mxu0 %v494
  %545 = vmatprep.subr.bf16.mxu0 0
  %546 = vmatpush2.bf16.msra.mxu0 0
  %547 = vmatprep.subr.bf16.mxu0 0
  %548 = vmatpush2.bf16.msra.mxu0 0
  %549 = vmatprep.subr.bf16.mxu0 0
  %550 = vmatpush2.bf16.msra.mxu0 0
  %551 = vmatprep.subr.bf16.mxu0 0
  %552 = vmatpush2.bf16.msra.mxu0 0
  %553 = vmatprep.subr.bf16.mxu0 0
  %554 = vmatpush2.bf16.msra.mxu0 0
  %555 = vmatprep.subr.bf16.mxu0 0
  %556 = vmatpush2.bf16.msra.mxu0 0
  %557 = vmatprep.subr.bf16.mxu0 0
  %558 = vmatpush2.bf16.msra.mxu0 0
  %559 = vmatprep.subr.bf16.mxu0 0
  %560 = vmatpush2.bf16.msra.mxu0 0
  %561 = vmatprep.mubr.bf16.mxu0 0
  %562 = vmatmul.mubr.bf16.gmra.mxu0 %v514
  %v563 = vpop.f32.mrf.mxu0
  %v564 = vadd.f32 %v510, %v563
  %v565 = vpop.f32.mrf.mxu0
  %v566 = vadd.f32 %v510, %v565
  %v567 = vpop.f32.mrf.mxu0
  %v568 = vpop.f32.mrf.mxu0
  %569 = vdwg.mxu0
  %570 = vmatprep.subr.bf16.mxu0 0
  %571 = vmatpush1.bf16.msra.mxu0 0
  %572 = vmatprep.subr.bf16.mxu0 0
  %573 = vmatpush1.bf16.msra.mxu0 0
  %574 = vmatprep.subr.bf16.mxu0 0
  %575 = vmatpush1.bf16.msra.mxu0 0
  %576 = vmatprep.subr.bf16.mxu0 0
  %577 = vmatpush1.bf16.msra.mxu0 0
  %578 = vmatprep.subr.bf16.mxu0 0
  %579 = vmatpush1.bf16.msra.mxu0 0
  %580 = vmatprep.subr.bf16.mxu0 %v527
  %581 = vmatpush1.bf16.msra.mxu0 %v524
  %582 = vmatprep.subr.bf16.mxu0 %v501
  %583 = vmatpush1.bf16.msra.mxu0 %v500
  %584 = vmatprep.subr.bf16.mxu0 %v497
  %585 = vmatpush1.bf16.msra.mxu0 %v496
  %586 = vmatprep.subr.bf16.mxu0 0
  %587 = vmatpush2.bf16.msra.mxu0 0
  %588 = vmatprep.subr.bf16.mxu0 0
  %589 = vmatpush2.bf16.msra.mxu0 0
  %590 = vmatprep.subr.bf16.mxu0 0
  %591 = vmatpush2.bf16.msra.mxu0 0
  %592 = vmatprep.subr.bf16.mxu0 0
  %593 = vmatpush2.bf16.msra.mxu0 0
  %594 = vmatprep.subr.bf16.mxu0 0
  %595 = vmatpush2.bf16.msra.mxu0 0
  %596 = vmatprep.subr.bf16.mxu0 0
  %597 = vmatpush2.bf16.msra.mxu0 0
  %598 = vmatprep.subr.bf16.mxu0 0
  %599 = vmatpush2.bf16.msra.mxu0 0
  %600 = vmatprep.subr.bf16.mxu0 0
  %601 = vmatpush2.bf16.msra.mxu0 0
  %602 = vmatprep.mubr.bf16.mxu0 0
  %603 = vmatmul.mubr.bf16.gmra.mxu0 %v514
  %v604 = vpop.f32.mrf.mxu0
  %v605 = vadd.f32 %v510, %v604
  %v606 = vpop.f32.mrf.mxu0
  %v607 = vadd.f32 %v510, %v606
  %v608 = vpop.f32.mrf.mxu0
  %v609 = vpop.f32.mrf.mxu0
  %610 = vdwg.mxu0
  %v611 = vmax.f32 %v564, 0.0
  %v612 = vmax.f32 %v566, 0.0
  %v613 = vmax.f32 %v605, 0.0
  %v614 = vmax.f32 %v607, 0.0
  %615 = vrot.lane.b32.xlu0 %v611, 17
  %v616 = vpop.permute.xlu0 %615
  %617 = vrot.lane.b32.xlu0 %v612, 17
  %v618 = vpop.permute.xlu0 %617
  %619 = vrot.lane.b32.xlu0 %v613, 17
  %v620 = vpop.permute.xlu0 %619
  %621 = vrot.lane.b32.xlu0 %v614, 17
  %v622 = vpop.permute.xlu0 %621
  %v623 = vsel %vm51, %v620, %v622
  %v624 = vsel %vm51, %v618, %v620
  %v625 = vsel %vm51, %v616, %v618
  %v626 = vsel %vm51, %v622, %v616
  %v627 = vld [vmem:[%s1] ss:$8 sm:$0xf]
  %v629 = vlaneseq
  %v630 = vshrl.u32 %v629, 7
  %v631 = vsub.s32 0, %v630
  %v632 = vrot.slane %v627, %v631
  %v633 = vlaneseq
  %v634 = vshrl.u32 %v633, 7
  %v635 = vsub.s32 1, %v634
  %v636 = vrot.slane %v627, %v635
  %v637 = vlaneseq
  %v638 = vshrl.u32 %v637, 7
  %v639 = vsub.s32 2, %v638
  %v640 = vrot.slane %v627, %v639
  %v641 = vlaneseq
  %v642 = vshrl.u32 %v641, 7
  %v643 = vsub.s32 3, %v642
  %v644 = vrot.slane %v627, %v643
  %v649 = vmul.f32 %v626, %v632
  %v650 = vmul.f32 %v625, %v636
  %v651 = vmul.f32 %v624, %v640
  %v652 = vmul.f32 %v623, %v644
  %653 = vst [vmem:[#allocation3] sm:$0xff] %v649
  %654 = vst [vmem:[#allocation3 + $0x8] sm:$0xff] %v650
  %655 = vst [vmem:[#allocation3 + $0x10] sm:$0xff] %v651
  %656 = vst [vmem:[#allocation3 + $0x18] sm:$0xff] %v652
  %657 = vrot.lane.b32.xlu0 %v611, 16
  %v658 = vpop.permute.xlu0 %657
  %659 = vrot.lane.b32.xlu0 %v612, 16
  %v660 = vpop.permute.xlu0 %659
  %661 = vrot.lane.b32.xlu0 %v613, 16
  %v662 = vpop.permute.xlu0 %661
  %663 = vrot.lane.b32.xlu0 %v614, 16
  %v664 = vpop.permute.xlu0 %663
  %v665 = vsel %vm94, %v662, %v664
  %v666 = vsel %vm94, %v660, %v662
  %v667 = vsel %vm94, %v658, %v660
  %v668 = vsel %vm94, %v664, %v658
  %v669 = vld [vmem:[%s99] ss:$8 sm:$0xf]
  %v671 = vlaneseq
  %v672 = vshrl.u32 %v671, 7
  %v673 = vsub.s32 0, %v672
  %v674 = vrot.slane %v669, %v673
  %v675 = vlaneseq
  %v676 = vshrl.u32 %v675, 7
  %v677 = vsub.s32 1, %v676
  %v678 = vrot.slane %v669, %v677
  %v679 = vlaneseq
  %v680 = vshrl.u32 %v679, 7
  %v681 = vsub.s32 2, %v680
  %v682 = vrot.slane %v669, %v681
  %v683 = vlaneseq
  %v684 = vshrl.u32 %v683, 7
  %v685 = vsub.s32 3, %v684
  %v686 = vrot.slane %v669, %v685
  %v691 = vmul.f32 %v668, %v674
  %v692 = vmul.f32 %v667, %v678
  %v693 = vmul.f32 %v666, %v682
  %v694 = vmul.f32 %v665, %v686
  %695 = vst [vmem:[#allocation3 + $0x20] sm:$0xff] %v691
  %696 = vst [vmem:[#allocation3 + $0x28] sm:$0xff] %v692
  %697 = vst [vmem:[#allocation3 + $0x30] sm:$0xff] %v693
  %698 = vst [vmem:[#allocation3 + $0x38] sm:$0xff] %v694
  %699 = vrot.lane.b32.xlu0 %v611, 15
  %v700 = vpop.permute.xlu0 %699
  %701 = vrot.lane.b32.xlu0 %v612, 15
  %v702 = vpop.permute.xlu0 %701
  %703 = vrot.lane.b32.xlu0 %v613, 15
  %v704 = vpop.permute.xlu0 %703
  %705 = vrot.lane.b32.xlu0 %v614, 15
  %v706 = vpop.permute.xlu0 %705
  %v707 = vsel %vm150, %v704, %v706
  %v708 = vsel %vm150, %v702, %v704
  %v709 = vsel %vm150, %v700, %v702
  %v710 = vsel %vm150, %v706, %v700
  %v711 = vld [vmem:[%s155] ss:$8 sm:$0xf]
  %v713 = vlaneseq
  %v714 = vshrl.u32 %v713, 7
  %v715 = vsub.s32 0, %v714
  %v716 = vrot.slane %v711, %v715
  %v717 = vlaneseq
  %v718 = vshrl.u32 %v717, 7
  %v719 = vsub.s32 1, %v718
  %v720 = vrot.slane %v711, %v719
  %v721 = vlaneseq
  %v722 = vshrl.u32 %v721, 7
  %v723 = vsub.s32 2, %v722
  %v724 = vrot.slane %v711, %v723
  %v725 = vlaneseq
  %v726 = vshrl.u32 %v725, 7
  %v727 = vsub.s32 3, %v726
  %v728 = vrot.slane %v711, %v727
  %v733 = vmul.f32 %v710, %v716
  %v734 = vmul.f32 %v709, %v720
  %v735 = vmul.f32 %v708, %v724
  %v736 = vmul.f32 %v707, %v728
  %737 = vst [vmem:[#allocation3 + $0x40] sm:$0xff] %v733
  %738 = vst [vmem:[#allocation3 + $0x48] sm:$0xff] %v734
  %739 = vst [vmem:[#allocation3 + $0x50] sm:$0xff] %v735
  %740 = vst [vmem:[#allocation3 + $0x58] sm:$0xff] %v736
  %741 = vrot.lane.b32.xlu0 %v611, 1
  %v742 = vpop.permute.xlu0 %741
  %743 = vrot.lane.b32.xlu0 %v612, 1
  %v744 = vpop.permute.xlu0 %743
  %745 = vrot.lane.b32.xlu0 %v613, 1
  %v746 = vpop.permute.xlu0 %745
  %747 = vrot.lane.b32.xlu0 %v614, 1
  %v748 = vpop.permute.xlu0 %747
  %v749 = vsel %vm194, %v746, %v748
  %v750 = vsel %vm194, %v744, %v746
  %v751 = vsel %vm194, %v742, %v744
  %v752 = vsel %vm194, %v748, %v742
  %v753 = vld [vmem:[%s199] ss:$8 sm:$0xf]
  %v755 = vlaneseq
  %v756 = vshrl.u32 %v755, 7
  %v757 = vsub.s32 0, %v756
  %v758 = vrot.slane %v753, %v757
  %v759 = vlaneseq
  %v760 = vshrl.u32 %v759, 7
  %v761 = vsub.s32 1, %v760
  %v762 = vrot.slane %v753, %v761
  %v763 = vlaneseq
  %v764 = vshrl.u32 %v763, 7
  %v765 = vsub.s32 2, %v764
  %v766 = vrot.slane %v753, %v765
  %v767 = vlaneseq
  %v768 = vshrl.u32 %v767, 7
  %v769 = vsub.s32 3, %v768
  %v770 = vrot.slane %v753, %v769
  %v775 = vmul.f32 %v752, %v758
  %v776 = vmul.f32 %v751, %v762
  %v777 = vmul.f32 %v750, %v766
  %v778 = vmul.f32 %v749, %v770
  %779 = vst [vmem:[#allocation3 + $0x60] sm:$0xff] %v775
  %780 = vst [vmem:[#allocation3 + $0x68] sm:$0xff] %v776
  %781 = vst [vmem:[#allocation3 + $0x70] sm:$0xff] %v777
  %782 = vst [vmem:[#allocation3 + $0x78] sm:$0xff] %v778
  %v783 = vld [vmem:[%s242] ss:$8 sm:$0xf]
  %v785 = vlaneseq
  %v786 = vshrl.u32 %v785, 7
  %v787 = vsub.s32 0, %v786
  %v788 = vrot.slane %v783, %v787
  %v789 = vlaneseq
  %v790 = vshrl.u32 %v789, 7
  %v791 = vsub.s32 1, %v790
  %v792 = vrot.slane %v783, %v791
  %v793 = vlaneseq
  %v794 = vshrl.u32 %v793, 7
  %v795 = vsub.s32 2, %v794
  %v796 = vrot.slane %v783, %v795
  %v797 = vlaneseq
  %v798 = vshrl.u32 %v797, 7
  %v799 = vsub.s32 3, %v798
  %v800 = vrot.slane %v783, %v799
  %v805 = vmul.f32 %v611, %v788
  %v806 = vmul.f32 %v612, %v792
  %v807 = vmul.f32 %v613, %v796
  %v808 = vmul.f32 %v614, %v800
  %809 = vst [vmem:[#allocation3 + $0x80] sm:$0xff] %v805
  %810 = vst [vmem:[#allocation3 + $0x88] sm:$0xff] %v806
  %811 = vst [vmem:[#allocation3 + $0x90] sm:$0xff] %v807
  %812 = vst [vmem:[#allocation3 + $0x98] sm:$0xff] %v808
  %813 = vrot.lane.b32.xlu0 %v611, 127
  %v814 = vpop.permute.xlu0 %813
  %815 = vrot.lane.b32.xlu0 %v612, 127
  %v816 = vpop.permute.xlu0 %815
  %817 = vrot.lane.b32.xlu0 %v613, 127
  %v818 = vpop.permute.xlu0 %817
  %819 = vrot.lane.b32.xlu0 %v614, 127
  %v820 = vpop.permute.xlu0 %819
  %v821 = vsel %vm281, %v818, %v820
  %v822 = vsel %vm281, %v816, %v818
  %v823 = vsel %vm281, %v814, %v816
  %v824 = vsel %vm281, %v820, %v814
  %v825 = vld [vmem:[%s286] ss:$8 sm:$0xf]
  %v827 = vlaneseq
  %v828 = vshrl.u32 %v827, 7
  %v829 = vsub.s32 0, %v828
  %v830 = vrot.slane %v825, %v829
  %v831 = vlaneseq
  %v832 = vshrl.u32 %v831, 7
  %v833 = vsub.s32 1, %v832
  %v834 = vrot.slane %v825, %v833
  %v835 = vlaneseq
  %v836 = vshrl.u32 %v835, 7
  %v837 = vsub.s32 2, %v836
  %v838 = vrot.slane %v825, %v837
  %v839 = vlaneseq
  %v840 = vshrl.u32 %v839, 7
  %v841 = vsub.s32 3, %v840
  %v842 = vrot.slane %v825, %v841
  %v847 = vmul.f32 %v823, %v830
  %v848 = vmul.f32 %v822, %v834
  %v849 = vmul.f32 %v821, %v838
  %v850 = vmul.f32 %v824, %v842
  %851 = vst [vmem:[#allocation3 + $0xa0] sm:$0xff] %v847
  %852 = vst [vmem:[#allocation3 + $0xa8] sm:$0xff] %v848
  %853 = vst [vmem:[#allocation3 + $0xb0] sm:$0xff] %v849
  %854 = vst [vmem:[#allocation3 + $0xb8] sm:$0xff] %v850
  %855 = vrot.lane.b32.xlu0 %v611, 113
  %v856 = vpop.permute.xlu0 %855
  %857 = vrot.lane.b32.xlu0 %v612, 113
  %v858 = vpop.permute.xlu0 %857
  %859 = vrot.lane.b32.xlu0 %v613, 113
  %v860 = vpop.permute.xlu0 %859
  %861 = vrot.lane.b32.xlu0 %v614, 113
  %v862 = vpop.permute.xlu0 %861
  %v863 = vsel %vm337, %v860, %v862
  %v864 = vsel %vm337, %v858, %v860
  %v865 = vsel %vm337, %v856, %v858
  %v866 = vsel %vm337, %v862, %v856
  %v867 = vld [vmem:[%s342] ss:$8 sm:$0xf]
  %v869 = vlaneseq
  %v870 = vshrl.u32 %v869, 7
  %v871 = vsub.s32 0, %v870
  %v872 = vrot.slane %v867, %v871
  %v873 = vlaneseq
  %v874 = vshrl.u32 %v873, 7
  %v875 = vsub.s32 1, %v874
  %v876 = vrot.slane %v867, %v875
  %v877 = vlaneseq
  %v878 = vshrl.u32 %v877, 7
  %v879 = vsub.s32 2, %v878
  %v880 = vrot.slane %v867, %v879
  %v881 = vlaneseq
  %v882 = vshrl.u32 %v881, 7
  %v883 = vsub.s32 3, %v882
  %v884 = vrot.slane %v867, %v883
  %v889 = vmul.f32 %v865, %v872
  %v890 = vmul.f32 %v864, %v876
  %v891 = vmul.f32 %v863, %v880
  %v892 = vmul.f32 %v866, %v884
  %893 = vst [vmem:[#allocation3 + $0xc0] sm:$0xff] %v889
  %894 = vst [vmem:[#allocation3 + $0xc8] sm:$0xff] %v890
  %895 = vst [vmem:[#allocation3 + $0xd0] sm:$0xff] %v891
  %896 = vst [vmem:[#allocation3 + $0xd8] sm:$0xff] %v892
  %897 = vrot.lane.b32.xlu0 %v611, 112
  %v898 = vpop.permute.xlu0 %897
  %899 = vrot.lane.b32.xlu0 %v612, 112
  %v900 = vpop.permute.xlu0 %899
  %901 = vrot.lane.b32.xlu0 %v613, 112
  %v902 = vpop.permute.xlu0 %901
  %903 = vrot.lane.b32.xlu0 %v614, 112
  %v904 = vpop.permute.xlu0 %903
  %v905 = vsel %vm381, %v902, %v904
  %v906 = vsel %vm381, %v900, %v902
  %v907 = vsel %vm381, %v898, %v900
  %v908 = vsel %vm381, %v904, %v898
  %v909 = vld [vmem:[%s386] ss:$8 sm:$0xf]
  %v911 = vlaneseq
  %v912 = vshrl.u32 %v911, 7
  %v913 = vsub.s32 0, %v912
  %v914 = vrot.slane %v909, %v913
  %v915 = vlaneseq
  %v916 = vshrl.u32 %v915, 7
  %v917 = vsub.s32 1, %v916
  %v918 = vrot.slane %v909, %v917
  %v919 = vlaneseq
  %v920 = vshrl.u32 %v919, 7
  %v921 = vsub.s32 2, %v920
  %v922 = vrot.slane %v909, %v921
  %v923 = vlaneseq
  %v924 = vshrl.u32 %v923, 7
  %v925 = vsub.s32 3, %v924
  %v926 = vrot.slane %v909, %v925
  %v931 = vmul.f32 %v907, %v914
  %v932 = vmul.f32 %v906, %v918
  %v933 = vmul.f32 %v905, %v922
  %v934 = vmul.f32 %v908, %v926
  %935 = vst [vmem:[#allocation3 + $0xe0] sm:$0xff] %v931
  %936 = vst [vmem:[#allocation3 + $0xe8] sm:$0xff] %v932
  %937 = vst [vmem:[#allocation3 + $0xf0] sm:$0xff] %v933
  %938 = vst [vmem:[#allocation3 + $0xf8] sm:$0xff] %v934
  %939 = vrot.lane.b32.xlu0 %v611, 111
  %v940 = vpop.permute.xlu0 %939
  %941 = vrot.lane.b32.xlu0 %v612, 111
  %v942 = vpop.permute.xlu0 %941
  %943 = vrot.lane.b32.xlu0 %v613, 111
  %v944 = vpop.permute.xlu0 %943
  %945 = vrot.lane.b32.xlu0 %v614, 111
  %v946 = vpop.permute.xlu0 %945
  %v947 = vsel %vm437, %v944, %v946
  %v948 = vsel %vm437, %v942, %v944
  %v949 = vsel %vm437, %v940, %v942
  %v950 = vsel %vm437, %v946, %v940
  %v951 = vld [vmem:[%s442] ss:$8 sm:$0xf]
  %v953 = vlaneseq
  %v954 = vshrl.u32 %v953, 7
  %v955 = vsub.s32 0, %v954
  %v956 = vrot.slane %v951, %v955
  %v957 = vlaneseq
  %v958 = vshrl.u32 %v957, 7
  %v959 = vsub.s32 1, %v958
  %v960 = vrot.slane %v951, %v959
  %v961 = vlaneseq
  %v962 = vshrl.u32 %v961, 7
  %v963 = vsub.s32 2, %v962
  %v964 = vrot.slane %v951, %v963
  %v965 = vlaneseq
  %v966 = vshrl.u32 %v965, 7
  %v967 = vsub.s32 3, %v966
  %v968 = vrot.slane %v951, %v967
  %v973 = vmul.f32 %v949, %v956
  %v974 = vmul.f32 %v948, %v960
  %v975 = vmul.f32 %v947, %v964
  %v976 = vmul.f32 %v950, %v968
  %977 = vst [vmem:[#allocation3 + $0x100] sm:$0xff] %v973
  %978 = vst [vmem:[#allocation3 + $0x108] sm:$0xff] %v974
  %979 = vst [vmem:[#allocation3 + $0x110] sm:$0xff] %v975
  %980 = vst [vmem:[#allocation3 + $0x118] sm:$0xff] %v976
  %v981 = vld [vmem:[%s4] sm:$0xf]
  %v982 = vld [vmem:[%s4 + $0x4] sm:$0xf]
  %v983 = vld [vmem:[#allocation3] sm:$0xff]
  %v984 = vld [vmem:[#allocation3 + $0x8] sm:$0xff]
  %v985 = vld [vmem:[#allocation3 + $0x10] sm:$0xff]
  %v986 = vld [vmem:[#allocation3 + $0x18] sm:$0xff]
  %v987 = vld [vmem:[#allocation3 + $0x20] sm:$0xff]
  %v988 = vld [vmem:[#allocation3 + $0x28] sm:$0xff]
  %v989 = vld [vmem:[#allocation3 + $0x30] sm:$0xff]
  %v990 = vld [vmem:[#allocation3 + $0x38] sm:$0xff]
  %v991 = vld [vmem:[#allocation3 + $0x40] sm:$0xff]
  %v992 = vld [vmem:[#allocation3 + $0x48] sm:$0xff]
  %v993 = vld [vmem:[#allocation3 + $0x50] sm:$0xff]
  %v994 = vld [vmem:[#allocation3 + $0x58] sm:$0xff]
  %v995 = vld [vmem:[#allocation3 + $0x60] sm:$0xff]
  %v996 = vld [vmem:[#allocation3 + $0x68] sm:$0xff]
  %v997 = vld [vmem:[#allocation3 + $0x70] sm:$0xff]
  %v998 = vld [vmem:[#allocation3 + $0x78] sm:$0xff]
  %v999 = vld [vmem:[#allocation3 + $0x80] sm:$0xff]
  %v1000 = vld [vmem:[#allocation3 + $0x88] sm:$0xff]
  %v1001 = vld [vmem:[#allocation3 + $0x90] sm:$0xff]
  %v1002 = vld [vmem:[#allocation3 + $0x98] sm:$0xff]
  %v1003 = vld [vmem:[#allocation3 + $0xa0] sm:$0xff]
  %v1004 = vld [vmem:[#allocation3 + $0xa8] sm:$0xff]
  %v1005 = vld [vmem:[#allocation3 + $0xb0] sm:$0xff]
  %v1006 = vld [vmem:[#allocation3 + $0xb8] sm:$0xff]
  %v1007 = vld [vmem:[#allocation3 + $0xc0] sm:$0xff]
  %v1008 = vld [vmem:[#allocation3 + $0xc8] sm:$0xff]
  %v1009 = vld [vmem:[#allocation3 + $0xd0] sm:$0xff]
  %v1010 = vld [vmem:[#allocation3 + $0xd8] sm:$0xff]
  %v1011 = vld [vmem:[#allocation3 + $0xe0] sm:$0xff]
  %v1012 = vld [vmem:[#allocation3 + $0xe8] sm:$0xff]
  %v1013 = vld [vmem:[#allocation3 + $0xf0] sm:$0xff]
  %v1014 = vld [vmem:[#allocation3 + $0xf8] sm:$0xff]
  %v1015 = vld [vmem:[#allocation3 + $0x100] sm:$0xff]
  %v1016 = vld [vmem:[#allocation3 + $0x108] sm:$0xff]
  %v1017 = vld [vmem:[#allocation3 + $0x110] sm:$0xff]
  %v1018 = vld [vmem:[#allocation3 + $0x118] sm:$0xff]
  %v1019 = vpack.c.bf16 %v987, %v983
  %v1020 = vpack.c.bf16 %v988, %v984
  %v1021 = vpack.c.bf16 %v989, %v985
  %v1022 = vpack.c.bf16 %v990, %v986
  %v1023 = vpack.c.bf16 %v995, %v991
  %v1024 = vpack.c.bf16 %v996, %v992
  %v1025 = vpack.c.bf16 %v997, %v993
  %v1026 = vpack.c.bf16 %v998, %v994
  %v1027 = vpack.c.bf16 %v1003, %v999
  %v1028 = vpack.c.bf16 %v1004, %v1000
  %v1029 = vpack.c.bf16 %v1005, %v1001
  %v1030 = vpack.c.bf16 %v1006, %v1002
  %v1031 = vpack.c.bf16 %v1011, %v1007
  %v1032 = vpack.c.bf16 %v1012, %v1008
  %v1033 = vpack.c.bf16 %v1013, %v1009
  %v1034 = vpack.c.bf16 %v1014, %v1010
  %v1035 = vpack.c.bf16 %v1015, %v1015
  %v1036 = vpack.c.bf16 %v1016, %v1016
  %v1037 = vpack.c.bf16 %v1017, %v1017
  %v1038 = vpack.c.bf16 %v1018, %v1018
  %v1039 = vld [vmem:[%s5] sm:$0xff]
  %v1040 = vld [vmem:[%s5 + $0x8] sm:$0xff]
  %1042 = vset.pattern.permute.xlu0 0
  %1043 = vperm.xlu0 %1042, %v1039
  %v1044 = vpop.permute.xlu0 %1043
  %1047 = vset.pattern.permute.xlu0 0
  %1048 = vperm.xlu0 %1047, %v1040
  %v1049 = vpop.permute.xlu0 %1048
  %v1053 = vunpack.c.l.b16 %v981
  %v1054 = vunpack.c.l.b16 %v982
  %v1055 = vpack.c.b16 %v1054, %v1053
  %vm1056 = vcmask 588800
  %v1058 = vsel %vm1056, %v1055, 0
  %vm1060 = vcmask 1043456
  %v1062 = vsel %vm1060, %v1035, 0
  %v1065 = vsel %vm1060, %v1036, 0
  %v1068 = vsel %vm1060, %v1037, 0
  %v1071 = vsel %vm1060, %v1038, 0
  %1073 = vmatprep.subr.bf16.mxu0 0
  %1074 = vmatpush1.bf16.msra.mxu0 0
  %1075 = vmatprep.subr.bf16.mxu0 0
  %1076 = vmatpush1.bf16.msra.mxu0 0
  %1077 = vmatprep.subr.bf16.mxu0 0
  %1078 = vmatpush1.bf16.msra.mxu0 0
  %1079 = vmatprep.subr.bf16.mxu0 %v1065
  %1080 = vmatpush1.bf16.msra.mxu0 %v1062
  %1081 = vmatprep.subr.bf16.mxu0 %v1032
  %1082 = vmatpush1.bf16.msra.mxu0 %v1031
  %1083 = vmatprep.subr.bf16.mxu0 %v1028
  %1084 = vmatpush1.bf16.msra.mxu0 %v1027
  %1085 = vmatprep.subr.bf16.mxu0 %v1024
  %1086 = vmatpush1.bf16.msra.mxu0 %v1023
  %1087 = vmatprep.subr.bf16.mxu0 %v1020
  %1088 = vmatpush1.bf16.msra.mxu0 %v1019
  %1089 = vmatprep.subr.bf16.mxu0 0
  %1090 = vmatpush2.bf16.msra.mxu0 0
  %1091 = vmatprep.subr.bf16.mxu0 0
  %1092 = vmatpush2.bf16.msra.mxu0 0
  %1093 = vmatprep.subr.bf16.mxu0 0
  %1094 = vmatpush2.bf16.msra.mxu0 0
  %1095 = vmatprep.subr.bf16.mxu0 0
  %1096 = vmatpush2.bf16.msra.mxu0 0
  %1097 = vmatprep.subr.bf16.mxu0 0
  %1098 = vmatpush2.bf16.msra.mxu0 0
  %1099 = vmatprep.subr.bf16.mxu0 0
  %1100 = vmatpush2.bf16.msra.mxu0 0
  %1101 = vmatprep.subr.bf16.mxu0 0
  %1102 = vmatpush2.bf16.msra.mxu0 0
  %1103 = vmatprep.subr.bf16.mxu0 0
  %1104 = vmatpush2.bf16.msra.mxu0 0
  %1105 = vmatprep.mubr.bf16.mxu0 0
  %1106 = vmatmul.mubr.bf16.gmra.mxu0 %v1058
  %v1107 = vpop.f32.mrf.mxu0
  %v1108 = vadd.f32 %v1044, %v1107
  %v1109 = vpop.f32.mrf.mxu0
  %v1110 = vadd.f32 %v1044, %v1109
  %v1111 = vpop.f32.mrf.mxu0
  %v1112 = vadd.f32 %v1049, %v1111
  %v1113 = vpop.f32.mrf.mxu0
  %v1114 = vadd.f32 %v1049, %v1113
  %1115 = vdwg.mxu0
  %1116 = vmatprep.subr.bf16.mxu0 0
  %1117 = vmatpush1.bf16.msra.mxu0 0
  %1118 = vmatprep.subr.bf16.mxu0 0
  %1119 = vmatpush1.bf16.msra.mxu0 0
  %1120 = vmatprep.subr.bf16.mxu0 0
  %1121 = vmatpush1.bf16.msra.mxu0 0
  %1122 = vmatprep.subr.bf16.mxu0 %v1071
  %1123 = vmatpush1.bf16.msra.mxu0 %v1068
  %1124 = vmatprep.subr.bf16.mxu0 %v1034
  %1125 = vmatpush1.bf16.msra.mxu0 %v1033
  %1126 = vmatprep.subr.bf16.mxu0 %v1030
  %1127 = vmatpush1.bf16.msra.mxu0 %v1029
  %1128 = vmatprep.subr.bf16.mxu0 %v1026
  %1129 = vmatpush1.bf16.msra.mxu0 %v1025
  %1130 = vmatprep.subr.bf16.mxu0 %v1022
  %1131 = vmatpush1.bf16.msra.mxu0 %v1021
  %1132 = vmatprep.subr.bf16.mxu0 0
  %1133 = vmatpush2.bf16.msra.mxu0 0
  %1134 = vmatprep.subr.bf16.mxu0 0
  %1135 = vmatpush2.bf16.msra.mxu0 0
  %1136 = vmatprep.subr.bf16.mxu0 0
  %1137 = vmatpush2.bf16.msra.mxu0 0
  %1138 = vmatprep.subr.bf16.mxu0 0
  %1139 = vmatpush2.bf16.msra.mxu0 0
  %1140 = vmatprep.subr.bf16.mxu0 0
  %1141 = vmatpush2.bf16.msra.mxu0 0
  %1142 = vmatprep.subr.bf16.mxu0 0
  %1143 = vmatpush2.bf16.msra.mxu0 0
  %1144 = vmatprep.subr.bf16.mxu0 0
  %1145 = vmatpush2.bf16.msra.mxu0 0
  %1146 = vmatprep.subr.bf16.mxu0 0
  %1147 = vmatpush2.bf16.msra.mxu0 0
  %1148 = vmatprep.mubr.bf16.mxu0 0
  %1149 = vmatmul.mubr.bf16.gmra.mxu0 %v1058
  %v1150 = vpop.f32.mrf.mxu0
  %v1151 = vadd.f32 %v1044, %v1150
  %v1152 = vpop.f32.mrf.mxu0
  %v1153 = vadd.f32 %v1044, %v1152
  %v1154 = vpop.f32.mrf.mxu0
  %v1155 = vadd.f32 %v1049, %v1154
  %v1156 = vpop.f32.mrf.mxu0
  %v1157 = vadd.f32 %v1049, %v1156
  %1158 = vdwg.mxu0
  %v1159 = vmax.f32 %v1108, 0.0
  %v1160 = vmax.f32 %v1110, 0.0
  %v1161 = vmax.f32 %v1151, 0.0
  %v1162 = vmax.f32 %v1153, 0.0
  %v1163 = vmax.f32 %v1112, 0.0
  %v1164 = vmax.f32 %v1114, 0.0
  %v1165 = vmax.f32 %v1155, 0.0
  %v1166 = vmax.f32 %v1157, 0.0
  %v1167 = vpack.c.bf16 %v1163, %v1159
  %v1168 = vpack.c.bf16 %v1164, %v1160
  %v1169 = vpack.c.bf16 %v1165, %v1161
  %v1170 = vpack.c.bf16 %v1166, %v1162
  %v1171 = vld [vmem:[%s6] sm:$0xf]
  %v1172 = vld [vmem:[%s6 + $0x4] sm:$0xf]
  %v1173 = vld [vmem:[%s6 + $0x8] sm:$0xf]
  %v1174 = vld [vmem:[%s6 + $0xc] sm:$0xf]
  %v1175 = vld [vmem:[%s6 + $0x10] sm:$0xf]
  %v1176 = vld [vmem:[%s6 + $0x14] sm:$0xf]
  %v1177 = vld [vmem:[%s6 + $0x18] sm:$0xf]
  %v1178 = vld [vmem:[%s6 + $0x1c] sm:$0xf]
  %v1179 = vld [vmem:[%s6 + $0x20] sm:$0xf]
  %v1180 = vld [vmem:[%s6 + $0x24] sm:$0xf]
  %v1181 = vld [vmem:[%s6 + $0x28] sm:$0xf]
  %v1182 = vld [vmem:[%s6 + $0x2c] sm:$0xf]
  %v1183 = vld [vmem:[%s6 + $0x30] sm:$0xf]
  %v1184 = vld [vmem:[%s6 + $0x34] sm:$0xf]
  %v1185 = vld [vmem:[%s6 + $0x38] sm:$0xf]
  %v1186 = vld [vmem:[%s6 + $0x3c] sm:$0xf]
  %v1187 = vld [vmem:[%s6 + $0x40] sm:$0xf]
  %v1188 = vld [vmem:[%s6 + $0x44] sm:$0xf]
  %v1189 = vld [vmem:[%s6 + $0x48] sm:$0xf]
  %v1190 = vld [vmem:[%s6 + $0x4c] sm:$0xf]
  %v1191 = vld [vmem:[%s6 + $0x50] sm:$0xf]
  %v1192 = vld [vmem:[%s6 + $0x54] sm:$0xf]
  %v1193 = vld [vmem:[%s6 + $0x58] sm:$0xf]
  %v1194 = vld [vmem:[%s6 + $0x5c] sm:$0xf]
  %v1195 = vld [vmem:[%s6 + $0x60] sm:$0xf]
  %v1196 = vld [vmem:[%s6 + $0x64] sm:$0xf]
  %v1197 = vld [vmem:[%s6 + $0x68] sm:$0xf]
  %v1198 = vld [vmem:[%s6 + $0x6c] sm:$0xf]
  %v1199 = vld [vmem:[%s6 + $0x70] sm:$0xf]
  %v1200 = vld [vmem:[%s6 + $0x74] sm:$0xf]
  %v1201 = vld [vmem:[%s6 + $0x78] sm:$0xf]
  %v1202 = vld [vmem:[%s6 + $0x7c] sm:$0xf]
  %v1203 = vld [vmem:[%s6 + $0x80] sm:$0xf]
  %v1204 = vld [vmem:[%s6 + $0x84] sm:$0xf]
  %v1205 = vld [vmem:[%s6 + $0x88] sm:$0xf]
  %v1206 = vld [vmem:[%s6 + $0x8c] sm:$0xf]
  %v1207 = vld [vmem:[%s6 + $0x90] sm:$0xf]
  %v1208 = vld [vmem:[%s6 + $0x94] sm:$0xf]
  %v1209 = vld [vmem:[%s6 + $0x98] sm:$0xf]
  %v1210 = vld [vmem:[%s6 + $0x9c] sm:$0xf]
  %v1211 = vld [vmem:[%s6 + $0xa0] sm:$0xf]
  %v1212 = vld [vmem:[%s6 + $0xa4] sm:$0xf]
  %v1213 = vld [vmem:[%s6 + $0xa8] sm:$0xf]
  %v1214 = vld [vmem:[%s6 + $0xac] sm:$0xf]
  %v1215 = vld [vmem:[%s6 + $0xb0] sm:$0xf]
  %v1216 = vld [vmem:[%s6 + $0xb4] sm:$0xf]
  %v1217 = vld [vmem:[%s6 + $0xb8] sm:$0xf]
  %v1218 = vld [vmem:[%s6 + $0xbc] sm:$0xf]
  %v1219 = vld [vmem:[%s6 + $0xc0] sm:$0xf]
  %v1220 = vld [vmem:[%s6 + $0xc4] sm:$0xf]
  %v1221 = vld [vmem:[%s6 + $0xc8] sm:$0xf]
  %v1222 = vld [vmem:[%s6 + $0xcc] sm:$0xf]
  %v1223 = vld [vmem:[%s6 + $0xd0] sm:$0xf]
  %v1224 = vld [vmem:[%s6 + $0xd4] sm:$0xf]
  %v1225 = vld [vmem:[%s6 + $0xd8] sm:$0xf]
  %v1226 = vld [vmem:[%s6 + $0xdc] sm:$0xf]
  %v1227 = vld [vmem:[%s6 + $0xe0] sm:$0xf]
  %v1228 = vld [vmem:[%s6 + $0xe4] sm:$0xf]
  %v1229 = vld [vmem:[%s6 + $0xe8] sm:$0xf]
  %v1230 = vld [vmem:[%s6 + $0xec] sm:$0xf]
  %v1231 = vld [vmem:[%s6 + $0xf0] sm:$0xf]
  %v1232 = vld [vmem:[%s6 + $0xf4] sm:$0xf]
  %v1233 = vld [vmem:[%s6 + $0xf8] sm:$0xf]
  %v1234 = vld [vmem:[%s6 + $0xfc] sm:$0xf]
  %v1299 = vunpack.c.l.b16 %v1171
  %v1300 = vunpack.c.l.b16 %v1172
  %v1301 = vunpack.c.l.b16 %v1173
  %v1302 = vunpack.c.l.b16 %v1174
  %v1303 = vunpack.c.l.b16 %v1175
  %v1304 = vunpack.c.l.b16 %v1176
  %v1305 = vunpack.c.l.b16 %v1177
  %v1306 = vunpack.c.l.b16 %v1178
  %v1307 = vunpack.c.l.b16 %v1179
  %v1308 = vunpack.c.l.b16 %v1180
  %v1309 = vunpack.c.l.b16 %v1181
  %v1310 = vunpack.c.l.b16 %v1182
  %v1311 = vunpack.c.l.b16 %v1183
  %v1312 = vunpack.c.l.b16 %v1184
  %v1313 = vunpack.c.l.b16 %v1185
  %v1314 = vunpack.c.l.b16 %v1186
  %v1315 = vunpack.c.l.b16 %v1187
  %v1316 = vunpack.c.l.b16 %v1188
  %v1317 = vunpack.c.l.b16 %v1189
  %v1318 = vunpack.c.l.b16 %v1190
  %v1319 = vunpack.c.l.b16 %v1191
  %v1320 = vunpack.c.l.b16 %v1192
  %v1321 = vunpack.c.l.b16 %v1193
  %v1322 = vunpack.c.l.b16 %v1194
  %v1323 = vunpack.c.l.b16 %v1195
  %v1324 = vunpack.c.l.b16 %v1196
  %v1325 = vunpack.c.l.b16 %v1197
  %v1326 = vunpack.c.l.b16 %v1198
  %v1327 = vunpack.c.l.b16 %v1199
  %v1328 = vunpack.c.l.b16 %v1200
  %v1329 = vunpack.c.l.b16 %v1201
  %v1330 = vunpack.c.l.b16 %v1202
  %v1331 = vunpack.c.l.b16 %v1203
  %v1332 = vunpack.c.l.b16 %v1204
  %v1333 = vunpack.c.l.b16 %v1205
  %v1334 = vunpack.c.l.b16 %v1206
  %v1335 = vunpack.c.l.b16 %v1207
  %v1336 = vunpack.c.l.b16 %v1208
  %v1337 = vunpack.c.l.b16 %v1209
  %v1338 = vunpack.c.l.b16 %v1210
  %v1339 = vunpack.c.l.b16 %v1211
  %v1340 = vunpack.c.l.b16 %v1212
  %v1341 = vunpack.c.l.b16 %v1213
  %v1342 = vunpack.c.l.b16 %v1214
  %v1343 = vunpack.c.l.b16 %v1215
  %v1344 = vunpack.c.l.b16 %v1216
  %v1345 = vunpack.c.l.b16 %v1217
  %v1346 = vunpack.c.l.b16 %v1218
  %v1347 = vunpack.c.l.b16 %v1219
  %v1348 = vunpack.c.l.b16 %v1220
  %v1349 = vunpack.c.l.b16 %v1221
  %v1350 = vunpack.c.l.b16 %v1222
  %v1351 = vunpack.c.l.b16 %v1223
  %v1352 = vunpack.c.l.b16 %v1224
  %v1353 = vunpack.c.l.b16 %v1225
  %v1354 = vunpack.c.l.b16 %v1226
  %v1355 = vunpack.c.l.b16 %v1227
  %v1356 = vunpack.c.l.b16 %v1228
  %v1357 = vunpack.c.l.b16 %v1229
  %v1358 = vunpack.c.l.b16 %v1230
  %v1359 = vunpack.c.l.b16 %v1231
  %v1360 = vunpack.c.l.b16 %v1232
  %v1361 = vunpack.c.l.b16 %v1233
  %v1362 = vunpack.c.l.b16 %v1234
  %v1363 = vpack.c.b16 %v1300, %v1299
  %v1364 = vpack.c.b16 %v1302, %v1301
  %v1365 = vpack.c.b16 %v1304, %v1303
  %v1366 = vpack.c.b16 %v1306, %v1305
  %v1367 = vpack.c.b16 %v1308, %v1307
  %v1368 = vpack.c.b16 %v1310, %v1309
  %v1369 = vpack.c.b16 %v1312, %v1311
  %v1370 = vpack.c.b16 %v1314, %v1313
  %v1371 = vpack.c.b16 %v1316, %v1315
  %v1372 = vpack.c.b16 %v1318, %v1317
  %v1373 = vpack.c.b16 %v1320, %v1319
  %v1374 = vpack.c.b16 %v1322, %v1321
  %v1375 = vpack.c.b16 %v1324, %v1323
  %v1376 = vpack.c.b16 %v1326, %v1325
  %v1377 = vpack.c.b16 %v1328, %v1327
  %v1378 = vpack.c.b16 %v1330, %v1329
  %v1379 = vpack.c.b16 %v1332, %v1331
  %v1380 = vpack.c.b16 %v1334, %v1333
  %v1381 = vpack.c.b16 %v1336, %v1335
  %v1382 = vpack.c.b16 %v1338, %v1337
  %v1383 = vpack.c.b16 %v1340, %v1339
  %v1384 = vpack.c.b16 %v1342, %v1341
  %v1385 = vpack.c.b16 %v1344, %v1343
  %v1386 = vpack.c.b16 %v1346, %v1345
  %v1387 = vpack.c.b16 %v1348, %v1347
  %v1388 = vpack.c.b16 %v1350, %v1349
  %v1389 = vpack.c.b16 %v1352, %v1351
  %v1390 = vpack.c.b16 %v1354, %v1353
  %v1391 = vpack.c.b16 %v1356, %v1355
  %v1392 = vpack.c.b16 %v1358, %v1357
  %v1393 = vpack.c.b16 %v1360, %v1359
  %v1394 = vpack.c.b16 %v1362, %v1361
  %1427 = vmatprep.subr.bf16.mxu0 0
  %1428 = vmatpush1.bf16.msra.mxu0 %v1370
  %1429 = vmatprep.subr.bf16.mxu0 0
  %1430 = vmatpush1.bf16.msra.mxu0 %v1369
  %1431 = vmatprep.subr.bf16.mxu0 0
  %1432 = vmatpush1.bf16.msra.mxu0 %v1368
  %1433 = vmatprep.subr.bf16.mxu0 0
  %1434 = vmatpush1.bf16.msra.mxu0 %v1367
  %1435 = vmatprep.subr.bf16.mxu0 0
  %1436 = vmatpush1.bf16.msra.mxu0 %v1366
  %1437 = vmatprep.subr.bf16.mxu0 0
  %1438 = vmatpush1.bf16.msra.mxu0 %v1365
  %1439 = vmatprep.subr.bf16.mxu0 0
  %1440 = vmatpush1.bf16.msra.mxu0 %v1364
  %1441 = vmatprep.subr.bf16.mxu0 0
  %1442 = vmatpush1.bf16.msra.mxu0 %v1363
  %1443 = vmatprep.subr.bf16.mxu0 0
  %1444 = vmatpush2.bf16.msra.mxu0 %v1378
  %1445 = vmatprep.subr.bf16.mxu0 0
  %1446 = vmatpush2.bf16.msra.mxu0 %v1377
  %1447 = vmatprep.subr.bf16.mxu0 0
  %1448 = vmatpush2.bf16.msra.mxu0 %v1376
  %1449 = vmatprep.subr.bf16.mxu0 0
  %1450 = vmatpush2.bf16.msra.mxu0 %v1375
  %1451 = vmatprep.subr.bf16.mxu0 0
  %1452 = vmatpush2.bf16.msra.mxu0 %v1374
  %1453 = vmatprep.subr.bf16.mxu0 0
  %1454 = vmatpush2.bf16.msra.mxu0 %v1373
  %1455 = vmatprep.subr.bf16.mxu0 0
  %1456 = vmatpush2.bf16.msra.mxu0 %v1372
  %1457 = vmatprep.subr.bf16.mxu0 0
  %1458 = vmatpush2.bf16.msra.mxu0 %v1371
  %1459 = vmatprep.mubr.bf16.mxu0 %v1168
  %1460 = vmatmul.mubr.bf16.gmra.mxu0 %v1167
  %v1461 = vpop.f32.mrf.mxu0
  %v1462 = vadd.f32 0.0, %v1461
  %v1463 = vpop.f32.mrf.mxu0
  %v1464 = vpop.f32.mrf.mxu0
  %v1465 = vadd.f32 0.0, %v1464
  %v1466 = vpop.f32.mrf.mxu0
  %1467 = vdwg.mxu0
  %1468 = vmatprep.subr.bf16.mxu0 0
  %1469 = vmatpush1.bf16.msra.mxu0 %v1386
  %1470 = vmatprep.subr.bf16.mxu0 0
  %1471 = vmatpush1.bf16.msra.mxu0 %v1385
  %1472 = vmatprep.subr.bf16.mxu0 0
  %1473 = vmatpush1.bf16.msra.mxu0 %v1384
  %1474 = vmatprep.subr.bf16.mxu0 0
  %1475 = vmatpush1.bf16.msra.mxu0 %v1383
  %1476 = vmatprep.subr.bf16.mxu0 0
  %1477 = vmatpush1.bf16.msra.mxu0 %v1382
  %1478 = vmatprep.subr.bf16.mxu0 0
  %1479 = vmatpush1.bf16.msra.mxu0 %v1381
  %1480 = vmatprep.subr.bf16.mxu0 0
  %1481 = vmatpush1.bf16.msra.mxu0 %v1380
  %1482 = vmatprep.subr.bf16.mxu0 0
  %1483 = vmatpush1.bf16.msra.mxu0 %v1379
  %1484 = vmatprep.subr.bf16.mxu0 0
  %1485 = vmatpush2.bf16.msra.mxu0 %v1394
  %1486 = vmatprep.subr.bf16.mxu0 0
  %1487 = vmatpush2.bf16.msra.mxu0 %v1393
  %1488 = vmatprep.subr.bf16.mxu0 0
  %1489 = vmatpush2.bf16.msra.mxu0 %v1392
  %1490 = vmatprep.subr.bf16.mxu0 0
  %1491 = vmatpush2.bf16.msra.mxu0 %v1391
  %1492 = vmatprep.subr.bf16.mxu0 0
  %1493 = vmatpush2.bf16.msra.mxu0 %v1390
  %1494 = vmatprep.subr.bf16.mxu0 0
  %1495 = vmatpush2.bf16.msra.mxu0 %v1389
  %1496 = vmatprep.subr.bf16.mxu0 0
  %1497 = vmatpush2.bf16.msra.mxu0 %v1388
  %1498 = vmatprep.subr.bf16.mxu0 0
  %1499 = vmatpush2.bf16.msra.mxu0 %v1387
  %1500 = vmatprep.mubr.bf16.mxu0 %v1170
  %1501 = vmatmul.mubr.bf16.gmra.mxu0 %v1169
  %v1502 = vpop.f32.mrf.mxu0
  %v1503 = vadd.f32 %v1462, %v1502
  %v1504 = vpop.f32.mrf.mxu0
  %v1505 = vpop.f32.mrf.mxu0
  %v1506 = vadd.f32 %v1465, %v1505
  %v1507 = vpop.f32.mrf.mxu0
  %1508 = vdwg.mxu0
  %v1509 = vld [vmem:[%s7] sm:$0xf]
  %v1510 = vld [vmem:[%s7 + $0x4] sm:$0x1]
  %v1511 = vpack.c.bf16 %v1506, %v1503
  %v1512 = vld [vmem:[%s8] sm:$0xff]
  %v1513 = vld [vmem:[%s8 + $0x8] sm:$0x3]
  %1515 = vset.pattern.permute.xlu0 0
  %1516 = vperm.xlu0 %1515, %v1512
  %v1517 = vpop.permute.xlu0 %1516
  %1520 = vset.pattern.permute.xlu0 0
  %1521 = vperm.xlu0 %1520, %v1513
  %v1522 = vpop.permute.xlu0 %1521
  %v1526 = vunpack.c.l.b16 %v1509
  %v1527 = vunpack.c.l.b16 %v1510
  %v1528 = vpack.c.b16 %v1527, %v1526
  %vm1529 = vcmask 130048
  %v1531 = vsel %vm1529, %v1528, 0
  %1533 = vmatprep.subr.bf16.mxu0 0
  %1534 = vmatpush1.bf16.msra.mxu0 0
  %1535 = vmatprep.subr.bf16.mxu0 0
  %1536 = vmatpush1.bf16.msra.mxu0 0
  %1537 = vmatprep.subr.bf16.mxu0 0
  %1538 = vmatpush1.bf16.msra.mxu0 0
  %1539 = vmatprep.subr.bf16.mxu0 0
  %1540 = vmatpush1.bf16.msra.mxu0 0
  %1541 = vmatprep.subr.bf16.mxu0 0
  %1542 = vmatpush1.bf16.msra.mxu0 0
  %1543 = vmatprep.subr.bf16.mxu0 0
  %1544 = vmatpush1.bf16.msra.mxu0 0
  %1545 = vmatprep.subr.bf16.mxu0 0
  %1546 = vmatpush1.bf16.msra.mxu0 0
  %1547 = vmatprep.subr.bf16.mxu0 0
  %1548 = vmatpush1.bf16.msra.mxu0 %v1511
  %1549 = vmatprep.subr.bf16.mxu0 0
  %1550 = vmatpush2.bf16.msra.mxu0 0
  %1551 = vmatprep.subr.bf16.mxu0 0
  %1552 = vmatpush2.bf16.msra.mxu0 0
  %1553 = vmatprep.subr.bf16.mxu0 0
  %1554 = vmatpush2.bf16.msra.mxu0 0
  %1555 = vmatprep.subr.bf16.mxu0 0
  %1556 = vmatpush2.bf16.msra.mxu0 0
  %1557 = vmatprep.subr.bf16.mxu0 0
  %1558 = vmatpush2.bf16.msra.mxu0 0
  %1559 = vmatprep.subr.bf16.mxu0 0
  %1560 = vmatpush2.bf16.msra.mxu0 0
  %1561 = vmatprep.subr.bf16.mxu0 0
  %1562 = vmatpush2.bf16.msra.mxu0 0
  %1563 = vmatprep.subr.bf16.mxu0 0
  %1564 = vmatpush2.bf16.msra.mxu0 0
  %1565 = vmatprep.mubr.bf16.mxu0 0
  %1566 = vmatmul.mubr.bf16.gmra.mxu0 %v1531
  %v1567 = vpop.f32.mrf.mxu0
  %v1568 = vadd.f32 %v1517, %v1567
  %v1569 = vpop.f32.mrf.mxu0
  %v1570 = vpop.f32.mrf.mxu0
  %v1571 = vadd.f32 %v1522, %v1570
  %v1572 = vpop.f32.mrf.mxu0
  %1573 = vdwg.mxu0
  %vm1574 = vcmask 15360
  %1575 = vst.msk [vmem:[%s9] sm:$0xff] %vm1574, %v1568
  %vm1576 = vcmask 9216
  %1577 = vst.msk [vmem:[%s9 + $0x8] sm:$0x3] %vm1576, %v1571
  // Predicated region
  $region38: #{finetune_net_forward.1} parent=0 // pred_check
    _
  $region39: #{finetune_net_forward.1} parent=0 // pred_check_branch
    %1579 = sbr.rel (0) target = $region41
  $region40: #{finetune_net_forward.1} parent=0 // pred_region
    _
  $region41: #{finetune_net_forward.1} parent=0 // pred_fallthru
    _
  // Predicated region
  $region42: #{finetune_net_forward.1} parent=0 // pred_check
    _
  $region43: #{finetune_net_forward.1} parent=0 // pred_check_branch
    %1581 = sbr.rel (0) target = $region45
  $region44: #{finetune_net_forward.1} parent=0 // pred_region
    _
  $region45: #{finetune_net_forward.1} parent=0 // pred_fallthru
    _

</llo_original>
